<compile_context>
chip_gen: v5e
topology: v5e:2x2
jax: 0.10.0
libtpu: 0.0.40
codegen_flags: <defaults>
</compile_context>

<pallas_src>
import numpy as np
import jax
import jax.numpy as jnp
from jax import lax
from jax.experimental import pallas as pl
from jax.experimental.pallas import tpu as pltpu

# ---- small, module-consistent sizes -----------------------------------------
E, H = 32, 32          # embed_size, hidden_size
B, T = 2, 8            # batch, max timesteps per patient
NC, NL, NP = 4, 4, 2   # chart / lab / procedure events per timestep
SPLIT = 200            # value-embedding table rows
LENGTHS = np.array([8, 6], dtype=np.int32)   # valid timesteps per patient


def _full_specs(arrays):
    """Full-array (single-block) BlockSpecs for a grid=(1,) launch."""
    return [pl.BlockSpec(a.shape, lambda i, _n=a.ndim: (0,) * _n) for a in arrays]


# ---------------------------------------------------------------------------
# Kernel 1: fused chart+lab map-Linear + per-timestep token max-pool
# ---------------------------------------------------------------------------
def token_pool(demo_e, chart_cat, lab_cat, proc_e, wc_t, bc, wl_t, bl):
    """pooled[b,t] = elementwise max over {5 demo tokens, NC mapped chart events,
    NL mapped lab events, NP procedure events}  (AdaptiveMaxPool1d(1) over tokens)."""
    Bb, Tt, Nc, twoE = chart_cat.shape
    Nl = lab_cat.shape[2]
    Np = proc_e.shape[2]
    Ee = twoE // 2
    BT = Bb * Tt

    # wrapper-side flattening / stacking (layout plumbing, free in XLA)
    rows_cl = jnp.concatenate([chart_cat.reshape(BT * Nc, twoE),
                               lab_cat.reshape(BT * Nl, twoE)], axis=0)  # (BT*(NC+NL),2E)
    proc_flat = proc_e.reshape(BT * Np, Ee)                              # (BT*NP, E)
    w_cl = jnp.concatenate([wc_t, wl_t], axis=1)                         # (2E, 2E)

    def kernel(rows_ref, proc_ref, demo_ref, wcl_ref, bc_ref, bl_ref, out_ref):
        # one MXU push for both maps: cols [0:E) chart projection, [E:2E) lab projection
        y = jnp.dot(rows_ref[...], wcl_ref[...], preferred_element_type=jnp.float32)
        ce = y[0:BT * Nc, 0:Ee]                         # chart rows, chart projection
        le = y[BT * Nc:BT * (Nc + Nl), Ee:2 * Ee]       # lab rows, lab projection
        cm = jnp.max(ce.reshape(BT, Nc, Ee), axis=1) + bc_ref[...]   # (BT, E)
        lm = jnp.max(le.reshape(BT, Nl, Ee), axis=1) + bl_ref[...]   # (BT, E)
        pm = jnp.max(proc_ref[...].reshape(BT, Np, Ee), axis=1)      # (BT, E)
        dm = jnp.max(demo_ref[...], axis=1)                          # (B, E) shared over t
        pooled = jnp.maximum(jnp.maximum(cm, lm), pm).reshape(Bb, Tt, Ee)
        out_ref[...] = jnp.maximum(pooled, dm[:, None, :])

    args = (rows_cl, proc_flat, demo_e, w_cl, bc, bl)
    return pl.pallas_call(
        kernel,
        out_shape=jax.ShapeDtypeStruct((Bb, Tt, Ee), jnp.float32),
        grid=(1,),
        in_specs=_full_specs(args),
        out_specs=pl.BlockSpec((Bb, Tt, Ee), lambda i: (0, 0, 0)),
        compiler_params=pltpu.CompilerParams(dimension_semantics=("arbitrary",)),
    )(*args)


# ---------------------------------------------------------------------------
# Kernel 2: fused bidirectional LSTM + masked max-pool over time + cls_head
# ---------------------------------------------------------------------------
def bilstm_pool_cls(xcat, mask, w_in, w_rec, b_cat, w_cls_pad, b_cls_pad, batch, t_steps):
    BP = xcat.shape[0] // t_steps          # sublane-padded batch rows per timestep
    eight_h = w_in.shape[1]                # 8H (both directions x 4 gates)
    two_h = w_rec.shape[0]                 # 2H (fwd | bwd hidden state)
    n_out = w_cls_pad.shape[1]             # 128 (lane-padded cls output)

    def kernel(x_ref, m_ref, wi_ref, wr_ref, b_ref, wc_ref, bc_ref, out_ref):
        # hoisted input projection: one MXU push covers all timesteps & both directions
        gx = (jnp.dot(x_ref[...], wi_ref[...], preferred_element_type=jnp.float32)
              + b_ref[...])                                        # (T*BP, 8H)
        lane = lax.broadcasted_iota(jnp.int32, (BP, eight_h), 1)
        is_g = (lane >= 2 * two_h) & (lane < 3 * two_h)            # tanh (cell cand.) quarter
        w_r = wr_ref[...]                                          # (2H, 8H) block-diag

        h = jnp.zeros((BP, two_h), jnp.float32)
        c = jnp.zeros((BP, two_h), jnp.float32)
        # finite "-inf" so an all-masked (padded) row cannot produce NaN downstream
        pooled = jnp.full((BP, two_h), -1e30, jnp.float32)

        for t in range(t_steps):                                   # static unroll (T=8)
            gx_t = gx[t * BP:(t + 1) * BP, :]                      # (BP, 8H), tile aligned
            m_t = m_ref[t * BP:(t + 1) * BP, :]                    # (BP, 1)
            gates = gx_t + jnp.dot(h, w_r, preferred_element_type=jnp.float32)
            act = jnp.where(is_g, jnp.tanh(gates), jax.nn.sigmoid(gates))  # full 256 lanes
            i_g = act[:, 0:two_h]
            f_g = act[:, two_h:2 * two_h]
            g_g = act[:, 2 * two_h:3 * two_h]
            o_g = act[:, 3 * two_h:4 * two_h]
            c_new = f_g * c + i_g * g_g
            h_new = o_g * jnp.tanh(c_new)
            h = m_t * h_new + (1.0 - m_t) * h                      # carry only valid steps
            c = m_t * c_new + (1.0 - m_t) * c
            pooled = jnp.where(m_t > 0.0, jnp.maximum(pooled, h_new), pooled)

        out_ref[...] = (jnp.dot(pooled, wc_ref[...], preferred_element_type=jnp.float32)
                        + bc_ref[...])                             # lane-dense (BP, 128)

    args = (xcat, mask, w_in, w_rec, b_cat, w_cls_pad, b_cls_pad)
    out = pl.pallas_call(
        kernel,
        out_shape=jax.ShapeDtypeStruct((BP, n_out), jnp.float32),
        grid=(1,),
        in_specs=_full_specs(args),
        out_specs=pl.BlockSpec((BP, n_out), lambda i: (0, 0)),
        compiler_params=pltpu.CompilerParams(dimension_semantics=("arbitrary",)),
    )(*args)
    return out[:batch, :2]


def build_bilstm_params(p):
    """Block-diagonal, gate-interleaved BiLSTM weights.
    Column order (8 blocks of H): [i_f, i_b, f_f, f_b, g_f, g_b, o_f, o_b]."""
    wi_f, wi_b = p["w_ih_f"].T, p["w_ih_b"].T      # (2E, 4H), cols [i,f,g,o]
    wh_f, wh_b = p["w_hh_f"].T, p["w_hh_b"].T      # (H, 4H)
    b_f = p["b_ih_f"] + p["b_hh_f"]
    b_b = p["b_ih_b"] + p["b_hh_b"]

    w_in = jnp.zeros((4 * E, 8 * H), jnp.float32)
    w_rec = jnp.zeros((2 * H, 8 * H), jnp.float32)
    b_parts = []
    for g in range(4):
        cf, cb = 2 * g * H, (2 * g + 1) * H
        w_in = w_in.at[0:2 * E, cf:cf + H].set(wi_f[:, g * H:(g + 1) * H])
        w_in = w_in.at[2 * E:4 * E, cb:cb + H].set(wi_b[:, g * H:(g + 1) * H])
        w_rec = w_rec.at[0:H, cf:cf + H].set(wh_f[:, g * H:(g + 1) * H])
        w_rec = w_rec.at[H:2 * H, cb:cb + H].set(wh_b[:, g * H:(g + 1) * H])
        b_parts += [b_f[g * H:(g + 1) * H], b_b[g * H:(g + 1) * H]]
    b_cat = jnp.concatenate(b_parts)[None, :]      # (1, 8H)
    return w_in, w_rec, b_cat


# ---------------------------------------------------------------------------
# Parameter / input construction (deterministic, in-script)
# ---------------------------------------------------------------------------
def value_embedding_data(d, split):
    vec = np.array([np.arange(split) * i for i in range(d // 2)],
                   dtype=np.float32).transpose()
    vec = vec / vec.max()
    emb = np.concatenate((np.sin(vec), np.cos(vec)), 1)
    emb[0, :d] = 0
    return jnp.asarray(emb, jnp.float32)


def init_params(key):
    ks = iter(jax.random.split(key, 40))
    nrm = lambda shape, s=0.1: jax.random.normal(next(ks), shape, jnp.float32) * s
    p = {}
    # demo embeddings
    p["anchor_age"] = nrm((9, E)); p["insurance"] = nrm((3, E))
    p["language"] = nrm((2, E)); p["marital"] = nrm((5, E)); p["ethnicity"] = nrm((8, E))
    # chart
    p["chart_var"] = nrm((9, E)); p["eye"] = nrm((4, E))
    p["motor"] = nrm((6, E)); p["verbal"] = nrm((6, E))
    p["chart_map_w"] = nrm((E, 2 * E)); p["chart_map_b"] = nrm((E,))
    # lab
    p["lab_var"] = nrm((22, E))
    p["lab_map_w"] = nrm((E, 2 * E)); p["lab_map_b"] = nrm((E,))
    # procedure
    p["operation"] = nrm((10, E))
    # shared sinusoidal value table (chart/lab values and time embedding)
    p["value_tbl"] = value_embedding_data(E, SPLIT)
    # bidirectional LSTM (PyTorch layout W_ih [4H,in], W_hh [4H,H])
    s = 1.0 / np.sqrt(H)
    uni = lambda shape: jax.random.uniform(next(ks), shape, jnp.float32, -s, s)
    for d in ("f", "b"):
        p[f"w_ih_{d}"] = uni((4 * H, 2 * E)); p[f"w_hh_{d}"] = uni((4 * H, H))
        p[f"b_ih_{d}"] = uni((4 * H,)); p[f"b_hh_{d}"] = uni((4 * H,))
    # cls_head
    p["cls_w"] = nrm((2, 2 * H)); p["cls_b"] = nrm((2,))
    return p


def make_inputs(key):
    ks = iter(jax.random.split(key, 16))
    demo = jnp.stack([
        jax.random.randint(next(ks), (B,), 1, 10),    # anchor_age in 1..9
        jax.random.randint(next(ks), (B,), 0, 3),     # insurance
        jax.random.randint(next(ks), (B,), 0, 2),     # language
        jax.random.randint(next(ks), (B,), -1, 4),    # marital_status in -1..3
        jax.random.randint(next(ks), (B,), 0, 8),     # ethnicity
    ], axis=1).astype(jnp.int32)
    chart_var = jax.random.randint(next(ks), (B, T, NC), 0, 9)
    v_eye = jax.random.randint(next(ks), (B, T, NC), 0, 4)
    v_gcs = jax.random.randint(next(ks), (B, T, NC), 0, 6)
    v_num = jax.random.randint(next(ks), (B, T, NC), 0, SPLIT)
    chart_val = jnp.where(chart_var == 0, v_eye,
                          jnp.where(chart_var < 3, v_gcs, v_num)).astype(jnp.int32)
    lab_var = jax.random.randint(next(ks), (B, T, NL), 0, 22)
    lab_val = jax.random.randint(next(ks), (B, T, NL), 0, SPLIT)
    proc = jax.random.randint(next(ks), (B, T, NP), 0, 10)
    time_h = jax.random.uniform(next(ks), (B, T), jnp.float32, 0.0, 48.0)
    lengths = jnp.asarray(LENGTHS)
    return demo, (chart_var, chart_val), (lab_var, lab_val), proc, time_h, lengths


# ---------------------------------------------------------------------------
# Full forward (glue + the two Pallas kernels)
# ---------------------------------------------------------------------------
def ehr_forward(params, demo, chart, lab, procedure, time_h, lengths):
    p = params
    chart_var, chart_val = chart
    lab_var, lab_val = lab

    # ---- embedding gathers (glue) ----
    demo_e = jnp.stack([
        p["anchor_age"][demo[:, 0] - 1],
        p["insurance"][demo[:, 1]],
        p["language"][demo[:, 2]],
        p["marital"][demo[:, 3] + 1],
        p["ethnicity"][demo[:, 4]],
    ], axis=1)                                                       # [B,5,E]

    cvar_e = p["chart_var"][chart_var]                               # [B,T,NC,E]
    v_eye = p["eye"][jnp.clip(chart_val, 0, 3)]
    v_mot = p["motor"][jnp.clip(chart_val, 0, 5)]
    v_ver = p["verbal"][jnp.clip(chart_val, 0, 5)]
    v_val = p["value_tbl"][jnp.clip(chart_val, 0, SPLIT - 1)]
    sel = chart_var[..., None]
    cval_e = jnp.where(sel == 0, v_eye,
             jnp.where(sel == 1, v_mot,
             jnp.where(sel == 2, v_ver, v_val)))
    chart_cat = jnp.concatenate([cvar_e, cval_e], axis=-1)           # [B,T,NC,2E]

    lab_cat = jnp.concatenate([p["lab_var"][lab_var],
                               p["value_tbl"][lab_val]], axis=-1)    # [B,T,NL,2E]
    proc_e = p["operation"][procedure]                               # [B,T,NP,E]

    # ---- Pallas kernel 1: fused map Linears + per-timestep token max-pool ----
    pooled = token_pool(demo_e, chart_cat, lab_cat, proc_e,
                        p["chart_map_w"].T, p["chart_map_b"][None, :],
                        p["lab_map_w"].T, p["lab_map_b"][None, :])   # [B,T,E]

    # ---- time embedding (trunc-bucketize into sinusoidal table, glue) ----
    t_idx = jnp.trunc((time_h / 48.0) / (1.0 / 200.0)).astype(jnp.int32)
    t_idx = jnp.clip(jnp.where(t_idx >= SPLIT, SPLIT - 1, t_idx), 0, SPLIT - 1)
    time_e = p["value_tbl"][t_idx]                                   # [B,T,E]

    x = jnp.concatenate([pooled, time_e], axis=-1)                   # [B,T,2E]

    # per-patient reverse within valid length (packed-sequence backward direction)
    rev_idx = jnp.clip(lengths[:, None] - 1 - jnp.arange(T)[None, :], 0, T - 1)
    x_bwd = jnp.take_along_axis(x, rev_idx[..., None], axis=1)       # [B,T,2E]

    # time-major, lane-concatenated [fwd | bwd] rows, sublane-padded batch B -> BP
    BP = -(-B // 8) * 8
    xcat = jnp.concatenate([x, x_bwd], axis=-1)                      # [B,T,4E]
    xcat = jnp.transpose(xcat, (1, 0, 2))                            # [T,B,4E]
    xcat = jnp.pad(xcat, ((0, 0), (0, BP - B), (0, 0))).reshape(T * BP, 4 * E)
    mask = (jnp.arange(T)[:, None] < lengths[None, :]).astype(jnp.float32)   # [T,B]
    mask = jnp.pad(mask, ((0, 0), (0, BP - B))).reshape(T * BP, 1)

    w_in, w_rec, b_cat = build_bilstm_params(p)
    w_cls_pad = jnp.zeros((2 * H, 128), jnp.float32).at[:, 0:2].set(p["cls_w"].T)
    b_cls_pad = jnp.zeros((1, 128), jnp.float32).at[0, 0:2].set(p["cls_b"])

    # ---- Pallas kernel 2: fused BiLSTM + masked max-pool over time + cls_head ----
    pred = bilstm_pool_cls(xcat, mask, w_in, w_rec, b_cat,
                           w_cls_pad, b_cls_pad, B, T)
    return pred                                                      # [B,2]


if __name__ == "__main__":
    key = jax.random.PRNGKey(0)
    kp, kx = jax.random.split(key)
    params = init_params(kp)
    demo, chart, lab, proc, time_h, lengths = make_inputs(kx)

    pred = jax.jit(ehr_forward)(params, demo, chart, lab, proc, time_h, lengths)
    jax.block_until_ready(pred)
    assert pred.shape == (B, 2) and pred.dtype == jnp.float32
    # TODO(synk): true ragged per-timestep event lists (variable NC/NL/NP) and
    # pack_sequence are emulated with fixed padded shapes + a length mask.
    print("KERNEL_OK")
</pallas_src>

<mosaic_0001>
module attributes {stable_mosaic.version = 11 : i64} {
  func.func @kernel(%arg0: i32, %arg1: memref<128x64xf32, #tpu.memory_space<vmem>>, %arg2: memref<32x32xf32, #tpu.memory_space<vmem>>, %arg3: memref<2x5x32xf32, #tpu.memory_space<vmem>>, %arg4: memref<64x64xf32, #tpu.memory_space<vmem>>, %arg5: memref<1x32xf32, #tpu.memory_space<vmem>>, %arg6: memref<1x32xf32, #tpu.memory_space<vmem>>, %arg7: memref<2x8x32xf32, #tpu.memory_space<vmem>>) attributes {dimension_semantics = [#tpu.dimension_semantics<arbitrary>], iteration_bounds = array<i64: 1>, scalar_prefetch = 0 : i64, scratch_operands = 0 : i64, tpu.core_type = #tpu.core_type<tc>, window_params = [{pipeline_mode = #tpu.pipeline_mode<synchronous>, transform_indices = @transform_0, window_bounds = array<i64: 128, 64>}, {pipeline_mode = #tpu.pipeline_mode<synchronous>, transform_indices = @transform_1, window_bounds = array<i64: 32, 32>}, {pipeline_mode = #tpu.pipeline_mode<synchronous>, transform_indices = @transform_2, window_bounds = array<i64: 2, 5, 32>}, {pipeline_mode = #tpu.pipeline_mode<synchronous>, transform_indices = @transform_3, window_bounds = array<i64: 64, 64>}, {pipeline_mode = #tpu.pipeline_mode<synchronous>, transform_indices = @transform_4, window_bounds = array<i64: 1, 32>}, {pipeline_mode = #tpu.pipeline_mode<synchronous>, transform_indices = @transform_5, window_bounds = array<i64: 1, 32>}, {pipeline_mode = #tpu.pipeline_mode<synchronous>, transform_indices = @transform_6, window_bounds = array<i64: 2, 8, 32>}]} {
    %c0 = arith.constant 0 : index
    %c0_0 = arith.constant 0 : index
    %0 = vector.load %arg1[%c0, %c0_0] : memref<128x64xf32, #tpu.memory_space<vmem>>, vector<128x64xf32>
    %c0_1 = arith.constant 0 : index
    %c0_2 = arith.constant 0 : index
    %1 = vector.load %arg4[%c0_1, %c0_2] : memref<64x64xf32, #tpu.memory_space<vmem>>, vector<64x64xf32>
    %cst = arith.constant dense<0.000000e+00> : vector<128x64xf32>
    %2 = tpu.matmul %0, %1, %cst {dimension_numbers = #tpu.dot_dimension_numbers<[1], [0], [0], [1], [0, 0, 1, 1], [], []>} : vector<128x64xf32>, vector<64x64xf32>, vector<128x64xf32> -> vector<128x64xf32>
    %3 = vector.extract_strided_slice %2 {offsets = [0, 0], sizes = [64, 32], strides = [1, 1]} : vector<128x64xf32> to vector<64x32xf32>
    %4 = vector.extract_strided_slice %2 {offsets = [64, 32], sizes = [64, 32], strides = [1, 1]} : vector<128x64xf32> to vector<64x32xf32>
    %5 = vector.shape_cast %3 : vector<64x32xf32> to vector<16x4x32xf32>
    %cst_3 = arith.constant dense<0xFF800000> : vector<16x32xf32>
    %6 = vector.multi_reduction <maximumf>, %5, %cst_3 [1] : vector<16x4x32xf32> to vector<16x32xf32>
    %c0_4 = arith.constant 0 : index
    %c0_5 = arith.constant 0 : index
    %7 = vector.load %arg5[%c0_4, %c0_5] : memref<1x32xf32, #tpu.memory_space<vmem>>, vector<1x32xf32>
    %8 = vector.broadcast %7 : vector<1x32xf32> to vector<16x32xf32>
    %9 = arith.addf %6, %8 : vector<16x32xf32>
    %10 = vector.shape_cast %4 : vector<64x32xf32> to vector<16x4x32xf32>
    %cst_6 = arith.constant dense<0xFF800000> : vector<16x32xf32>
    %11 = vector.multi_reduction <maximumf>, %10, %cst_6 [1] : vector<16x4x32xf32> to vector<16x32xf32>
    %c0_7 = arith.constant 0 : index
    %c0_8 = arith.constant 0 : index
    %12 = vector.load %arg6[%c0_7, %c0_8] : memref<1x32xf32, #tpu.memory_space<vmem>>, vector<1x32xf32>
    %13 = vector.broadcast %12 : vector<1x32xf32> to vector<16x32xf32>
    %14 = arith.addf %11, %13 : vector<16x32xf32>
    %c0_9 = arith.constant 0 : index
    %c0_10 = arith.constant 0 : index
    %15 = vector.load %arg2[%c0_9, %c0_10] : memref<32x32xf32, #tpu.memory_space<vmem>>, vector<32x32xf32>
    %16 = vector.shape_cast %15 : vector<32x32xf32> to vector<16x2x32xf32>
    %cst_11 = arith.constant dense<0xFF800000> : vector<16x32xf32>
    %17 = vector.multi_reduction <maximumf>, %16, %cst_11 [1] : vector<16x2x32xf32> to vector<16x32xf32>
    %c0_12 = arith.constant 0 : index
    %c0_13 = arith.constant 0 : index
    %c0_14 = arith.constant 0 : index
    %18 = vector.load %arg3[%c0_12, %c0_13, %c0_14] : memref<2x5x32xf32, #tpu.memory_space<vmem>>, vector<2x5x32xf32>
    %cst_15 = arith.constant dense<0xFF800000> : vector<2x32xf32>
    %19 = vector.multi_reduction <maximumf>, %18, %cst_15 [1] : vector<2x5x32xf32> to vector<2x32xf32>
    %20 = arith.maximumf %9, %14 : vector<16x32xf32>
    %21 = arith.maximumf %20, %17 : vector<16x32xf32>
    %22 = vector.shape_cast %21 : vector<16x32xf32> to vector<2x8x32xf32>
    %23 = vector.shape_cast %19 : vector<2x32xf32> to vector<2x1x32xf32>
    %24 = vector.broadcast %23 : vector<2x1x32xf32> to vector<2x8x32xf32>
    %25 = arith.maximumf %22, %24 : vector<2x8x32xf32>
    %c0_16 = arith.constant 0 : index
    %c0_17 = arith.constant 0 : index
    %c0_18 = arith.constant 0 : index
    %26 = vector.load %arg7[%c0_16, %c0_17, %c0_18] : memref<2x8x32xf32, #tpu.memory_space<vmem>>, vector<2x8x32xf32>
    tpu.vector_store %arg7[%c0_16, %c0_17, %c0_18], %25 {strides = array<i32>} : memref<2x8x32xf32, #tpu.memory_space<vmem>>, vector<2x8x32xf32>,
    return
  }
  func.func @transform_0(%arg0: i32) -> (i32, i32) {
    %c0_i32 = arith.constant 0 : i32
    %c0_i32_0 = arith.constant 0 : i32
    %c0_i32_1 = arith.constant 0 : i32
    return %c0_i32, %c0_i32_0 : i32, i32
  }
  func.func @transform_1(%arg0: i32) -> (i32, i32) {
    %c0_i32 = arith.constant 0 : i32
    %c0_i32_0 = arith.constant 0 : i32
    %c0_i32_1 = arith.constant 0 : i32
    return %c0_i32, %c0_i32_0 : i32, i32
  }
  func.func @transform_2(%arg0: i32) -> (i32, i32, i32) {
    %c0_i32 = arith.constant 0 : i32
    %c0_i32_0 = arith.constant 0 : i32
    %c0_i32_1 = arith.constant 0 : i32
    %c0_i32_2 = arith.constant 0 : i32
    return %c0_i32, %c0_i32_0, %c0_i32_1 : i32, i32, i32
  }
  func.func @transform_3(%arg0: i32) -> (i32, i32) {
    %c0_i32 = arith.constant 0 : i32
    %c0_i32_0 = arith.constant 0 : i32
    %c0_i32_1 = arith.constant 0 : i32
    return %c0_i32, %c0_i32_0 : i32, i32
  }
  func.func @transform_4(%arg0: i32) -> (i32, i32) {
    %c0_i32 = arith.constant 0 : i32
    %c0_i32_0 = arith.constant 0 : i32
    %c0_i32_1 = arith.constant 0 : i32
    return %c0_i32, %c0_i32_0 : i32, i32
  }
  func.func @transform_5(%arg0: i32) -> (i32, i32) {
    %c0_i32 = arith.constant 0 : i32
    %c0_i32_0 = arith.constant 0 : i32
    %c0_i32_1 = arith.constant 0 : i32
    return %c0_i32, %c0_i32_0 : i32, i32
  }
  func.func @transform_6(%arg0: i32) -> (i32, i32, i32) {
    %c0_i32 = arith.constant 0 : i32
    %c0_i32_0 = arith.constant 0 : i32
    %c0_i32_1 = arith.constant 0 : i32
    %c0_i32_2 = arith.constant 0 : i32
    return %c0_i32, %c0_i32_0, %c0_i32_1 : i32, i32, i32
  }
}

module attributes {stable_mosaic.version = 11 : i64} {
  func.func @kernel(%arg0: i32, %arg1: memref<64x128xf32, #tpu.memory_space<vmem>>, %arg2: memref<64x1xf32, #tpu.memory_space<vmem>>, %arg3: memref<128x256xf32, #tpu.memory_space<vmem>>, %arg4: memref<64x256xf32, #tpu.memory_space<vmem>>, %arg5: memref<1x256xf32, #tpu.memory_space<vmem>>, %arg6: memref<64x128xf32, #tpu.memory_space<vmem>>, %arg7: memref<1x128xf32, #tpu.memory_space<vmem>>, %arg8: memref<8x128xf32, #tpu.memory_space<vmem>>) attributes {dimension_semantics = [#tpu.dimension_semantics<arbitrary>], iteration_bounds = array<i64: 1>, scalar_prefetch = 0 : i64, scratch_operands = 0 : i64, tpu.core_type = #tpu.core_type<tc>, window_params = [{pipeline_mode = #tpu.pipeline_mode<synchronous>, transform_indices = @transform_0, window_bounds = array<i64: 64, 128>}, {pipeline_mode = #tpu.pipeline_mode<synchronous>, transform_indices = @transform_1, window_bounds = array<i64: 64, 1>}, {pipeline_mode = #tpu.pipeline_mode<synchronous>, transform_indices = @transform_2, window_bounds = array<i64: 128, 256>}, {pipeline_mode = #tpu.pipeline_mode<synchronous>, transform_indices = @transform_3, window_bounds = array<i64: 64, 256>}, {pipeline_mode = #tpu.pipeline_mode<synchronous>, transform_indices = @transform_4, window_bounds = array<i64: 1, 256>}, {pipeline_mode = #tpu.pipeline_mode<synchronous>, transform_indices = @transform_5, window_bounds = array<i64: 64, 128>}, {pipeline_mode = #tpu.pipeline_mode<synchronous>, transform_indices = @transform_6, window_bounds = array<i64: 1, 128>}, {pipeline_mode = #tpu.pipeline_mode<synchronous>, transform_indices = @transform_7, window_bounds = array<i64: 8, 128>}]} {
    %c0 = arith.constant 0 : index
    %c0_0 = arith.constant 0 : index
    %0 = vector.load %arg1[%c0, %c0_0] : memref<64x128xf32, #tpu.memory_space<vmem>>, vector<64x128xf32>
    %c0_1 = arith.constant 0 : index
    %c0_2 = arith.constant 0 : index
    %1 = vector.load %arg3[%c0_1, %c0_2] : memref<128x256xf32, #tpu.memory_space<vmem>>, vector<128x256xf32>
    %cst = arith.constant dense<0.000000e+00> : vector<64x256xf32>
    %2 = tpu.matmul %0, %1, %cst {dimension_numbers = #tpu.dot_dimension_numbers<[1], [0], [0], [1], [0, 0, 1, 1], [], []>} : vector<64x128xf32>, vector<128x256xf32>, vector<64x256xf32> -> vector<64x256xf32>
    %c0_3 = arith.constant 0 : index
    %c0_4 = arith.constant 0 : index
    %3 = vector.load %arg5[%c0_3, %c0_4] : memref<1x256xf32, #tpu.memory_space<vmem>>, vector<1x256xf32>
    %4 = vector.broadcast %3 : vector<1x256xf32> to vector<64x256xf32>
    %5 = arith.addf %2, %4 : vector<64x256xf32>
    %6 = tpu.iota {dimensions = array<i32: 1>} : vector<8x256xi32>
    %c128_i32 = arith.constant 128 : i32
    %7 = vector.broadcast %c128_i32 : i32 to vector<8x256xi32>
    %8 = arith.cmpi sge, %6, %7 : vector<8x256xi32>
    %c192_i32 = arith.constant 192 : i32
    %9 = vector.broadcast %c192_i32 : i32 to vector<8x256xi32>
    %10 = arith.cmpi slt, %6, %9 : vector<8x256xi32>
    %11 = arith.andi %8, %10 : vector<8x256xi1>
    %c0_5 = arith.constant 0 : index
    %c0_6 = arith.constant 0 : index
    %12 = vector.load %arg4[%c0_5, %c0_6] : memref<64x256xf32, #tpu.memory_space<vmem>>, vector<64x256xf32>
    %cst_7 = arith.constant 0.000000e+00 : f32
    %13 = vector.broadcast %cst_7 : f32 to vector<8x64xf32>
    %cst_8 = arith.constant 0.000000e+00 : f32
    %14 = vector.broadcast %cst_8 : f32 to vector<8x64xf32>
    %cst_9 = arith.constant -1.000000e+30 : f32
    %15 = vector.broadcast %cst_9 : f32 to vector<8x64xf32>
    %16 = vector.extract_strided_slice %5 {offsets = [0, 0], sizes = [8, 256], strides = [1, 1]} : vector<64x256xf32> to vector<8x256xf32>
    %c0_10 = arith.constant 0 : index
    %c0_11 = arith.constant 0 : index
    %17 = vector.load %arg2[%c0_10, %c0_11] : memref<64x1xf32, #tpu.memory_space<vmem>>, vector<8x1xf32>
    %cst_12 = arith.constant dense<0.000000e+00> : vector<8x256xf32>
    %18 = tpu.matmul %13, %12, %cst_12 {dimension_numbers = #tpu.dot_dimension_numbers<[1], [0], [0], [1], [0, 0, 1, 1], [], []>} : vector<8x64xf32>, vector<64x256xf32>, vector<8x256xf32> -> vector<8x256xf32>
    %19 = arith.addf %16, %18 : vector<8x256xf32>
    %20 = math.tanh %19 : vector<8x256xf32>
    %21 = arith.negf %19 : vector<8x256xf32>
    %22 = math.exp %21 : vector<8x256xf32>
    %cst_13 = arith.constant 1.000000e+00 : f32
    %23 = vector.broadcast %cst_13 : f32 to vector<8x256xf32>
    %24 = arith.addf %23, %22 : vector<8x256xf32>
    %25 = arith.divf %23, %24 : vector<8x256xf32>
    %26 = arith.select %11, %20, %25 : vector<8x256xi1>, vector<8x256xf32>
    %27 = vector.extract_strided_slice %26 {offsets = [0, 0], sizes = [8, 64], strides = [1, 1]} : vector<8x256xf32> to vector<8x64xf32>
    %28 = vector.extract_strided_slice %26 {offsets = [0, 64], sizes = [8, 64], strides = [1, 1]} : vector<8x256xf32> to vector<8x64xf32>
    %29 = vector.extract_strided_slice %26 {offsets = [0, 128], sizes = [8, 64], strides = [1, 1]} : vector<8x256xf32> to vector<8x64xf32>
    %30 = vector.extract_strided_slice %26 {offsets = [0, 192], sizes = [8, 64], strides = [1, 1]} : vector<8x256xf32> to vector<8x64xf32>
    %31 = arith.mulf %28, %14 : vector<8x64xf32>
    %32 = arith.mulf %27, %29 : vector<8x64xf32>
    %33 = arith.addf %31, %32 : vector<8x64xf32>
    %34 = math.tanh %33 : vector<8x64xf32>
    %35 = arith.mulf %30, %34 : vector<8x64xf32>
    %36 = vector.broadcast %17 : vector<8x1xf32> to vector<8x64xf32>
    %37 = arith.mulf %36, %35 : vector<8x64xf32>
    %cst_14 = arith.constant 1.000000e+00 : f32
    %38 = vector.broadcast %cst_14 : f32 to vector<8x1xf32>
    %39 = arith.subf %38, %17 : vector<8x1xf32>
    %40 = vector.broadcast %39 : vector<8x1xf32> to vector<8x64xf32>
    %41 = arith.mulf %40, %13 : vector<8x64xf32>
    %42 = arith.addf %37, %41 : vector<8x64xf32>
    %43 = vector.broadcast %17 : vector<8x1xf32> to vector<8x64xf32>
    %44 = arith.mulf %43, %33 : vector<8x64xf32>
    %cst_15 = arith.constant 1.000000e+00 : f32
    %45 = vector.broadcast %cst_15 : f32 to vector<8x1xf32>
    %46 = arith.subf %45, %17 : vector<8x1xf32>
    %47 = vector.broadcast %46 : vector<8x1xf32> to vector<8x64xf32>
    %48 = arith.mulf %47, %14 : vector<8x64xf32>
    %49 = arith.addf %44, %48 : vector<8x64xf32>
    %cst_16 = arith.constant 0.000000e+00 : f32
    %50 = vector.broadcast %cst_16 : f32 to vector<8x1xf32>
    %51 = arith.cmpf ogt, %17, %50 : vector<8x1xf32>
    %52 = arith.maximumf %15, %35 : vector<8x64xf32>
    %53 = vector.shape_cast %51 : vector<8x1xi1> to vector<8x1xi1>
    %54 = vector.broadcast %53 : vector<8x1xi1> to vector<8x64xi1>
    %55 = arith.select %54, %52, %15 : vector<8x64xi1>, vector<8x64xf32>
    %56 = vector.extract_strided_slice %5 {offsets = [8, 0], sizes = [8, 256], strides = [1, 1]} : vector<64x256xf32> to vector<8x256xf32>
    %c8 = arith.constant 8 : index
    %c0_17 = arith.constant 0 : index
    %57 = vector.load %arg2[%c8, %c0_17] : memref<64x1xf32, #tpu.memory_space<vmem>>, vector<8x1xf32>
    %cst_18 = arith.constant dense<0.000000e+00> : vector<8x256xf32>
    %58 = tpu.matmul %42, %12, %cst_18 {dimension_numbers = #tpu.dot_dimension_numbers<[1], [0], [0], [1], [0, 0, 1, 1], [], []>} : vector<8x64xf32>, vector<64x256xf32>, vector<8x256xf32> -> vector<8x256xf32>
    %59 = arith.addf %56, %58 : vector<8x256xf32>
    %60 = math.tanh %59 : vector<8x256xf32>
    %61 = arith.negf %59 : vector<8x256xf32>
    %62 = math.exp %61 : vector<8x256xf32>
    %cst_19 = arith.constant 1.000000e+00 : f32
    %63 = vector.broadcast %cst_19 : f32 to vector<8x256xf32>
    %64 = arith.addf %63, %62 : vector<8x256xf32>
    %65 = arith.divf %63, %64 : vector<8x256xf32>
    %66 = arith.select %11, %60, %65 : vector<8x256xi1>, vector<8x256xf32>
    %67 = vector.extract_strided_slice %66 {offsets = [0, 0], sizes = [8, 64], strides = [1, 1]} : vector<8x256xf32> to vector<8x64xf32>
    %68 = vector.extract_strided_slice %66 {offsets = [0, 64], sizes = [8, 64], strides = [1, 1]} : vector<8x256xf32> to vector<8x64xf32>
    %69 = vector.extract_strided_slice %66 {offsets = [0, 128], sizes = [8, 64], strides = [1, 1]} : vector<8x256xf32> to vector<8x64xf32>
    %70 = vector.extract_strided_slice %66 {offsets = [0, 192], sizes = [8, 64], strides = [1, 1]} : vector<8x256xf32> to vector<8x64xf32>
    %71 = arith.mulf %68, %49 : vector<8x64xf32>
    %72 = arith.mulf %67, %69 : vector<8x64xf32>
    %73 = arith.addf %71, %72 : vector<8x64xf32>
    %74 = math.tanh %73 : vector<8x64xf32>
    %75 = arith.mulf %70, %74 : vector<8x64xf32>
    %76 = vector.broadcast %57 : vector<8x1xf32> to vector<8x64xf32>
    %77 = arith.mulf %76, %75 : vector<8x64xf32>
    %cst_20 = arith.constant 1.000000e+00 : f32
    %78 = vector.broadcast %cst_20 : f32 to vector<8x1xf32>
    %79 = arith.subf %78, %57 : vector<8x1xf32>
    %80 = vector.broadcast %79 : vector<8x1xf32> to vector<8x64xf32>
    %81 = arith.mulf %80, %42 : vector<8x64xf32>
    %82 = arith.addf %77, %81 : vector<8x64xf32>
    %83 = vector.broadcast %57 : vector<8x1xf32> to vector<8x64xf32>
    %84 = arith.mulf %83, %73 : vector<8x64xf32>
    %cst_21 = arith.constant 1.000000e+00 : f32
    %85 = vector.broadcast %cst_21 : f32 to vector<8x1xf32>
    %86 = arith.subf %85, %57 : vector<8x1xf32>
    %87 = vector.broadcast %86 : vector<8x1xf32> to vector<8x64xf32>
    %88 = arith.mulf %87, %49 : vector<8x64xf32>
    %89 = arith.addf %84, %88 : vector<8x64xf32>
    %cst_22 = arith.constant 0.000000e+00 : f32
    %90 = vector.broadcast %cst_22 : f32 to vector<8x1xf32>
    %91 = arith.cmpf ogt, %57, %90 : vector<8x1xf32>
    %92 = arith.maximumf %55, %75 : vector<8x64xf32>
    %93 = vector.shape_cast %91 : vector<8x1xi1> to vector<8x1xi1>
    %94 = vector.broadcast %93 : vector<8x1xi1> to vector<8x64xi1>
    %95 = arith.select %94, %92, %55 : vector<8x64xi1>, vector<8x64xf32>
    %96 = vector.extract_strided_slice %5 {offsets = [16, 0], sizes = [8, 256], strides = [1, 1]} : vector<64x256xf32> to vector<8x256xf32>
    %c16 = arith.constant 16 : index
    %c0_23 = arith.constant 0 : index
    %97 = vector.load %arg2[%c16, %c0_23] : memref<64x1xf32, #tpu.memory_space<vmem>>, vector<8x1xf32>
    %cst_24 = arith.constant dense<0.000000e+00> : vector<8x256xf32>
    %98 = tpu.matmul %82, %12, %cst_24 {dimension_numbers = #tpu.dot_dimension_numbers<[1], [0], [0], [1], [0, 0, 1, 1], [], []>} : vector<8x64xf32>, vector<64x256xf32>, vector<8x256xf32> -> vector<8x256xf32>
    %99 = arith.addf %96, %98 : vector<8x256xf32>
    %100 = math.tanh %99 : vector<8x256xf32>
    %101 = arith.negf %99 : vector<8x256xf32>
    %102 = math.exp %101 : vector<8x256xf32>
    %cst_25 = arith.constant 1.000000e+00 : f32
    %103 = vector.broadcast %cst_25 : f32 to vector<8x256xf32>
    %104 = arith.addf %103, %102 : vector<8x256xf32>
    %105 = arith.divf %103, %104 : vector<8x256xf32>
    %106 = arith.select %11, %100, %105 : vector<8x256xi1>, vector<8x256xf32>
    %107 = vector.extract_strided_slice %106 {offsets = [0, 0], sizes = [8, 64], strides = [1, 1]} : vector<8x256xf32> to vector<8x64xf32>
    %108 = vector.extract_strided_slice %106 {offsets = [0, 64], sizes = [8, 64], strides = [1, 1]} : vector<8x256xf32> to vector<8x64xf32>
    %109 = vector.extract_strided_slice %106 {offsets = [0, 128], sizes = [8, 64], strides = [1, 1]} : vector<8x256xf32> to vector<8x64xf32>
    %110 = vector.extract_strided_slice %106 {offsets = [0, 192], sizes = [8, 64], strides = [1, 1]} : vector<8x256xf32> to vector<8x64xf32>
    %111 = arith.mulf %108, %89 : vector<8x64xf32>
    %112 = arith.mulf %107, %109 : vector<8x64xf32>
    %113 = arith.addf %111, %112 : vector<8x64xf32>
    %114 = math.tanh %113 : vector<8x64xf32>
    %115 = arith.mulf %110, %114 : vector<8x64xf32>
    %116 = vector.broadcast %97 : vector<8x1xf32> to vector<8x64xf32>
    %117 = arith.mulf %116, %115 : vector<8x64xf32>
    %cst_26 = arith.constant 1.000000e+00 : f32
    %118 = vector.broadcast %cst_26 : f32 to vector<8x1xf32>
    %119 = arith.subf %118, %97 : vector<8x1xf32>
    %120 = vector.broadcast %119 : vector<8x1xf32> to vector<8x64xf32>
    %121 = arith.mulf %120, %82 : vector<8x64xf32>
    %122 = arith.addf %117, %121 : vector<8x64xf32>
    %123 = vector.broadcast %97 : vector<8x1xf32> to vector<8x64xf32>
    %124 = arith.mulf %123, %113 : vector<8x64xf32>
    %cst_27 = arith.constant 1.000000e+00 : f32
    %125 = vector.broadcast %cst_27 : f32 to vector<8x1xf32>
    %126 = arith.subf %125, %97 : vector<8x1xf32>
    %127 = vector.broadcast %126 : vector<8x1xf32> to vector<8x64xf32>
    %128 = arith.mulf %127, %89 : vector<8x64xf32>
    %129 = arith.addf %124, %128 : vector<8x64xf32>
    %cst_28 = arith.constant 0.000000e+00 : f32
    %130 = vector.broadcast %cst_28 : f32 to vector<8x1xf32>
    %131 = arith.cmpf ogt, %97, %130 : vector<8x1xf32>
    %132 = arith.maximumf %95, %115 : vector<8x64xf32>
    %133 = vector.shape_cast %131 : vector<8x1xi1> to vector<8x1xi1>
    %134 = vector.broadcast %133 : vector<8x1xi1> to vector<8x64xi1>
    %135 = arith.select %134, %132, %95 : vector<8x64xi1>, vector<8x64xf32>
    %136 = vector.extract_strided_slice %5 {offsets = [24, 0], sizes = [8, 256], strides = [1, 1]} : vector<64x256xf32> to vector<8x256xf32>
    %c24 = arith.constant 24 : index
    %c0_29 = arith.constant 0 : index
    %137 = vector.load %arg2[%c24, %c0_29] : memref<64x1xf32, #tpu.memory_space<vmem>>, vector<8x1xf32>
    %cst_30 = arith.constant dense<0.000000e+00> : vector<8x256xf32>
    %138 = tpu.matmul %122, %12, %cst_30 {dimension_numbers = #tpu.dot_dimension_numbers<[1], [0], [0], [1], [0, 0, 1, 1], [], []>} : vector<8x64xf32>, vector<64x256xf32>, vector<8x256xf32> -> vector<8x256xf32>
    %139 = arith.addf %136, %138 : vector<8x256xf32>
    %140 = math.tanh %139 : vector<8x256xf32>
    %141 = arith.negf %139 : vector<8x256xf32>
    %142 = math.exp %141 : vector<8x256xf32>
    %cst_31 = arith.constant 1.000000e+00 : f32
    %143 = vector.broadcast %cst_31 : f32 to vector<8x256xf32>
    %144 = arith.addf %143, %142 : vector<8x256xf32>
    %145 = arith.divf %143, %144 : vector<8x256xf32>
    %146 = arith.select %11, %140, %145 : vector<8x256xi1>, vector<8x256xf32>
    %147 = vector.extract_strided_slice %146 {offsets = [0, 0], sizes = [8, 64], strides = [1, 1]} : vector<8x256xf32> to vector<8x64xf32>
    %148 = vector.extract_strided_slice %146 {offsets = [0, 64], sizes = [8, 64], strides = [1, 1]} : vector<8x256xf32> to vector<8x64xf32>
    %149 = vector.extract_strided_slice %146 {offsets = [0, 128], sizes = [8, 64], strides = [1, 1]} : vector<8x256xf32> to vector<8x64xf32>
    %150 = vector.extract_strided_slice %146 {offsets = [0, 192], sizes = [8, 64], strides = [1, 1]} : vector<8x256xf32> to vector<8x64xf32>
    %151 = arith.mulf %148, %129 : vector<8x64xf32>
    %152 = arith.mulf %147, %149 : vector<8x64xf32>
    %153 = arith.addf %151, %152 : vector<8x64xf32>
    %154 = math.tanh %153 : vector<8x64xf32>
    %155 = arith.mulf %150, %154 : vector<8x64xf32>
    %156 = vector.broadcast %137 : vector<8x1xf32> to vector<8x64xf32>
    %157 = arith.mulf %156, %155 : vector<8x64xf32>
    %cst_32 = arith.constant 1.000000e+00 : f32
    %158 = vector.broadcast %cst_32 : f32 to vector<8x1xf32>
    %159 = arith.subf %158, %137 : vector<8x1xf32>
    %160 = vector.broadcast %159 : vector<8x1xf32> to vector<8x64xf32>
    %161 = arith.mulf %160, %122 : vector<8x64xf32>
    %162 = arith.addf %157, %161 : vector<8x64xf32>
    %163 = vector.broadcast %137 : vector<8x1xf32> to vector<8x64xf32>
    %164 = arith.mulf %163, %153 : vector<8x64xf32>
    %cst_33 = arith.constant 1.000000e+00 : f32
    %165 = vector.broadcast %cst_33 : f32 to vector<8x1xf32>
    %166 = arith.subf %165, %137 : vector<8x1xf32>
    %167 = vector.broadcast %166 : vector<8x1xf32> to vector<8x64xf32>
    %168 = arith.mulf %167, %129 : vector<8x64xf32>
    %169 = arith.addf %164, %168 : vector<8x64xf32>
    %cst_34 = arith.constant 0.000000e+00 : f32
    %170 = vector.broadcast %cst_34 : f32 to vector<8x1xf32>
    %171 = arith.cmpf ogt, %137, %170 : vector<8x1xf32>
    %172 = arith.maximumf %135, %155 : vector<8x64xf32>
    %173 = vector.shape_cast %171 : vector<8x1xi1> to vector<8x1xi1>
    %174 = vector.broadcast %173 : vector<8x1xi1> to vector<8x64xi1>
    %175 = arith.select %174, %172, %135 : vector<8x64xi1>, vector<8x64xf32>
    %176 = vector.extract_strided_slice %5 {offsets = [32, 0], sizes = [8, 256], strides = [1, 1]} : vector<64x256xf32> to vector<8x256xf32>
    %c32 = arith.constant 32 : index
    %c0_35 = arith.constant 0 : index
    %177 = vector.load %arg2[%c32, %c0_35] : memref<64x1xf32, #tpu.memory_space<vmem>>, vector<8x1xf32>
    %cst_36 = arith.constant dense<0.000000e+00> : vector<8x256xf32>
    %178 = tpu.matmul %162, %12, %cst_36 {dimension_numbers = #tpu.dot_dimension_numbers<[1], [0], [0], [1], [0, 0, 1, 1], [], []>} : vector<8x64xf32>, vector<64x256xf32>, vector<8x256xf32> -> vector<8x256xf32>
    %179 = arith.addf %176, %178 : vector<8x256xf32>
    %180 = math.tanh %179 : vector<8x256xf32>
    %181 = arith.negf %179 : vector<8x256xf32>
    %182 = math.exp %181 : vector<8x256xf32>
    %cst_37 = arith.constant 1.000000e+00 : f32
    %183 = vector.broadcast %cst_37 : f32 to vector<8x256xf32>
    %184 = arith.addf %183, %182 : vector<8x256xf32>
    %185 = arith.divf %183, %184 : vector<8x256xf32>
    %186 = arith.select %11, %180, %185 : vector<8x256xi1>, vector<8x256xf32>
    %187 = vector.extract_strided_slice %186 {offsets = [0, 0], sizes = [8, 64], strides = [1, 1]} : vector<8x256xf32> to vector<8x64xf32>
    %188 = vector.extract_strided_slice %186 {offsets = [0, 64], sizes = [8, 64], strides = [1, 1]} : vector<8x256xf32> to vector<8x64xf32>
    %189 = vector.extract_strided_slice %186 {offsets = [0, 128], sizes = [8, 64], strides = [1, 1]} : vector<8x256xf32> to vector<8x64xf32>
    %190 = vector.extract_strided_slice %186 {offsets = [0, 192], sizes = [8, 64], strides = [1, 1]} : vector<8x256xf32> to vector<8x64xf32>
    %191 = arith.mulf %188, %169 : vector<8x64xf32>
    %192 = arith.mulf %187, %189 : vector<8x64xf32>
    %193 = arith.addf %191, %192 : vector<8x64xf32>
    %194 = math.tanh %193 : vector<8x64xf32>
    %195 = arith.mulf %190, %194 : vector<8x64xf32>
    %196 = vector.broadcast %177 : vector<8x1xf32> to vector<8x64xf32>
    %197 = arith.mulf %196, %195 : vector<8x64xf32>
    %cst_38 = arith.constant 1.000000e+00 : f32
    %198 = vector.broadcast %cst_38 : f32 to vector<8x1xf32>
    %199 = arith.subf %198, %177 : vector<8x1xf32>
    %200 = vector.broadcast %199 : vector<8x1xf32> to vector<8x64xf32>
    %201 = arith.mulf %200, %162 : vector<8x64xf32>
    %202 = arith.addf %197, %201 : vector<8x64xf32>
    %203 = vector.broadcast %177 : vector<8x1xf32> to vector<8x64xf32>
    %204 = arith.mulf %203, %193 : vector<8x64xf32>
    %cst_39 = arith.constant 1.000000e+00 : f32
    %205 = vector.broadcast %cst_39 : f32 to vector<8x1xf32>
    %206 = arith.subf %205, %177 : vector<8x1xf32>
    %207 = vector.broadcast %206 : vector<8x1xf32> to vector<8x64xf32>
    %208 = arith.mulf %207, %169 : vector<8x64xf32>
    %209 = arith.addf %204, %208 : vector<8x64xf32>
    %cst_40 = arith.constant 0.000000e+00 : f32
    %210 = vector.broadcast %cst_40 : f32 to vector<8x1xf32>
    %211 = arith.cmpf ogt, %177, %210 : vector<8x1xf32>
    %212 = arith.maximumf %175, %195 : vector<8x64xf32>
    %213 = vector.shape_cast %211 : vector<8x1xi1> to vector<8x1xi1>
    %214 = vector.broadcast %213 : vector<8x1xi1> to vector<8x64xi1>
    %215 = arith.select %214, %212, %175 : vector<8x64xi1>, vector<8x64xf32>
    %216 = vector.extract_strided_slice %5 {offsets = [40, 0], sizes = [8, 256], strides = [1, 1]} : vector<64x256xf32> to vector<8x256xf32>
    %c40 = arith.constant 40 : index
    %c0_41 = arith.constant 0 : index
    %217 = vector.load %arg2[%c40, %c0_41] : memref<64x1xf32, #tpu.memory_space<vmem>>, vector<8x1xf32>
    %cst_42 = arith.constant dense<0.000000e+00> : vector<8x256xf32>
    %218 = tpu.matmul %202, %12, %cst_42 {dimension_numbers = #tpu.dot_dimension_numbers<[1], [0], [0], [1], [0, 0, 1, 1], [], []>} : vector<8x64xf32>, vector<64x256xf32>, vector<8x256xf32> -> vector<8x256xf32>
    %219 = arith.addf %216, %218 : vector<8x256xf32>
    %220 = math.tanh %219 : vector<8x256xf32>
    %221 = arith.negf %219 : vector<8x256xf32>
    %222 = math.exp %221 : vector<8x256xf32>
    %cst_43 = arith.constant 1.000000e+00 : f32
    %223 = vector.broadcast %cst_43 : f32 to vector<8x256xf32>
    %224 = arith.addf %223, %222 : vector<8x256xf32>
    %225 = arith.divf %223, %224 : vector<8x256xf32>
    %226 = arith.select %11, %220, %225 : vector<8x256xi1>, vector<8x256xf32>
    %227 = vector.extract_strided_slice %226 {offsets = [0, 0], sizes = [8, 64], strides = [1, 1]} : vector<8x256xf32> to vector<8x64xf32>
    %228 = vector.extract_strided_slice %226 {offsets = [0, 64], sizes = [8, 64], strides = [1, 1]} : vector<8x256xf32> to vector<8x64xf32>
    %229 = vector.extract_strided_slice %226 {offsets = [0, 128], sizes = [8, 64], strides = [1, 1]} : vector<8x256xf32> to vector<8x64xf32>
    %230 = vector.extract_strided_slice %226 {offsets = [0, 192], sizes = [8, 64], strides = [1, 1]} : vector<8x256xf32> to vector<8x64xf32>
    %231 = arith.mulf %228, %209 : vector<8x64xf32>
    %232 = arith.mulf %227, %229 : vector<8x64xf32>
    %233 = arith.addf %231, %232 : vector<8x64xf32>
    %234 = math.tanh %233 : vector<8x64xf32>
    %235 = arith.mulf %230, %234 : vector<8x64xf32>
    %236 = vector.broadcast %217 : vector<8x1xf32> to vector<8x64xf32>
    %237 = arith.mulf %236, %235 : vector<8x64xf32>
    %cst_44 = arith.constant 1.000000e+00 : f32
    %238 = vector.broadcast %cst_44 : f32 to vector<8x1xf32>
    %239 = arith.subf %238, %217 : vector<8x1xf32>
    %240 = vector.broadcast %239 : vector<8x1xf32> to vector<8x64xf32>
    %241 = arith.mulf %240, %202 : vector<8x64xf32>
    %242 = arith.addf %237, %241 : vector<8x64xf32>
    %243 = vector.broadcast %217 : vector<8x1xf32> to vector<8x64xf32>
    %244 = arith.mulf %243, %233 : vector<8x64xf32>
    %cst_45 = arith.constant 1.000000e+00 : f32
    %245 = vector.broadcast %cst_45 : f32 to vector<8x1xf32>
    %246 = arith.subf %245, %217 : vector<8x1xf32>
    %247 = vector.broadcast %246 : vector<8x1xf32> to vector<8x64xf32>
    %248 = arith.mulf %247, %209 : vector<8x64xf32>
    %249 = arith.addf %244, %248 : vector<8x64xf32>
    %cst_46 = arith.constant 0.000000e+00 : f32
    %250 = vector.broadcast %cst_46 : f32 to vector<8x1xf32>
    %251 = arith.cmpf ogt, %217, %250 : vector<8x1xf32>
    %252 = arith.maximumf %215, %235 : vector<8x64xf32>
    %253 = vector.shape_cast %251 : vector<8x1xi1> to vector<8x1xi1>
    %254 = vector.broadcast %253 : vector<8x1xi1> to vector<8x64xi1>
    %255 = arith.select %254, %252, %215 : vector<8x64xi1>, vector<8x64xf32>
    %256 = vector.extract_strided_slice %5 {offsets = [48, 0], sizes = [8, 256], strides = [1, 1]} : vector<64x256xf32> to vector<8x256xf32>
    %c48 = arith.constant 48 : index
    %c0_47 = arith.constant 0 : index
    %257 = vector.load %arg2[%c48, %c0_47] : memref<64x1xf32, #tpu.memory_space<vmem>>, vector<8x1xf32>
    %cst_48 = arith.constant dense<0.000000e+00> : vector<8x256xf32>
    %258 = tpu.matmul %242, %12, %cst_48 {dimension_numbers = #tpu.dot_dimension_numbers<[1], [0], [0], [1], [0, 0, 1, 1], [], []>} : vector<8x64xf32>, vector<64x256xf32>, vector<8x256xf32> -> vector<8x256xf32>
    %259 = arith.addf %256, %258 : vector<8x256xf32>
    %260 = math.tanh %259 : vector<8x256xf32>
    %261 = arith.negf %259 : vector<8x256xf32>
    %262 = math.exp %261 : vector<8x256xf32>
    %cst_49 = arith.constant 1.000000e+00 : f32
    %263 = vector.broadcast %cst_49 : f32 to vector<8x256xf32>
    %264 = arith.addf %263, %262 : vector<8x256xf32>
    %265 = arith.divf %263, %264 : vector<8x256xf32>
    %266 = arith.select %11, %260, %265 : vector<8x256xi1>, vector<8x256xf32>
    %267 = vector.extract_strided_slice %266 {offsets = [0, 0], sizes = [8, 64], strides = [1, 1]} : vector<8x256xf32> to vector<8x64xf32>
    %268 = vector.extract_strided_slice %266 {offsets = [0, 64], sizes = [8, 64], strides = [1, 1]} : vector<8x256xf32> to vector<8x64xf32>
    %269 = vector.extract_strided_slice %266 {offsets = [0, 128], sizes = [8, 64], strides = [1, 1]} : vector<8x256xf32> to vector<8x64xf32>
    %270 = vector.extract_strided_slice %266 {offsets = [0, 192], sizes = [8, 64], strides = [1, 1]} : vector<8x256xf32> to vector<8x64xf32>
    %271 = arith.mulf %268, %249 : vector<8x64xf32>
    %272 = arith.mulf %267, %269 : vector<8x64xf32>
    %273 = arith.addf %271, %272 : vector<8x64xf32>
    %274 = math.tanh %273 : vector<8x64xf32>
    %275 = arith.mulf %270, %274 : vector<8x64xf32>
    %276 = vector.broadcast %257 : vector<8x1xf32> to vector<8x64xf32>
    %277 = arith.mulf %276, %275 : vector<8x64xf32>
    %cst_50 = arith.constant 1.000000e+00 : f32
    %278 = vector.broadcast %cst_50 : f32 to vector<8x1xf32>
    %279 = arith.subf %278, %257 : vector<8x1xf32>
    %280 = vector.broadcast %279 : vector<8x1xf32> to vector<8x64xf32>
    %281 = arith.mulf %280, %242 : vector<8x64xf32>
    %282 = arith.addf %277, %281 : vector<8x64xf32>
    %283 = vector.broadcast %257 : vector<8x1xf32> to vector<8x64xf32>
    %284 = arith.mulf %283, %273 : vector<8x64xf32>
    %cst_51 = arith.constant 1.000000e+00 : f32
    %285 = vector.broadcast %cst_51 : f32 to vector<8x1xf32>
    %286 = arith.subf %285, %257 : vector<8x1xf32>
    %287 = vector.broadcast %286 : vector<8x1xf32> to vector<8x64xf32>
    %288 = arith.mulf %287, %249 : vector<8x64xf32>
    %289 = arith.addf %284, %288 : vector<8x64xf32>
    %cst_52 = arith.constant 0.000000e+00 : f32
    %290 = vector.broadcast %cst_52 : f32 to vector<8x1xf32>
    %291 = arith.cmpf ogt, %257, %290 : vector<8x1xf32>
    %292 = arith.maximumf %255, %275 : vector<8x64xf32>
    %293 = vector.shape_cast %291 : vector<8x1xi1> to vector<8x1xi1>
    %294 = vector.broadcast %293 : vector<8x1xi1> to vector<8x64xi1>
    %295 = arith.select %294, %292, %255 : vector<8x64xi1>, vector<8x64xf32>
    %296 = vector.extract_strided_slice %5 {offsets = [56, 0], sizes = [8, 256], strides = [1, 1]} : vector<64x256xf32> to vector<8x256xf32>
    %c56 = arith.constant 56 : index
    %c0_53 = arith.constant 0 : index
    %297 = vector.load %arg2[%c56, %c0_53] : memref<64x1xf32, #tpu.memory_space<vmem>>, vector<8x1xf32>
    %cst_54 = arith.constant dense<0.000000e+00> : vector<8x256xf32>
    %298 = tpu.matmul %282, %12, %cst_54 {dimension_numbers = #tpu.dot_dimension_numbers<[1], [0], [0], [1], [0, 0, 1, 1], [], []>} : vector<8x64xf32>, vector<64x256xf32>, vector<8x256xf32> -> vector<8x256xf32>
    %299 = arith.addf %296, %298 : vector<8x256xf32>
    %300 = math.tanh %299 : vector<8x256xf32>
    %301 = arith.negf %299 : vector<8x256xf32>
    %302 = math.exp %301 : vector<8x256xf32>
    %cst_55 = arith.constant 1.000000e+00 : f32
    %303 = vector.broadcast %cst_55 : f32 to vector<8x256xf32>
    %304 = arith.addf %303, %302 : vector<8x256xf32>
    %305 = arith.divf %303, %304 : vector<8x256xf32>
    %306 = arith.select %11, %300, %305 : vector<8x256xi1>, vector<8x256xf32>
    %307 = vector.extract_strided_slice %306 {offsets = [0, 0], sizes = [8, 64], strides = [1, 1]} : vector<8x256xf32> to vector<8x64xf32>
    %308 = vector.extract_strided_slice %306 {offsets = [0, 64], sizes = [8, 64], strides = [1, 1]} : vector<8x256xf32> to vector<8x64xf32>
    %309 = vector.extract_strided_slice %306 {offsets = [0, 128], sizes = [8, 64], strides = [1, 1]} : vector<8x256xf32> to vector<8x64xf32>
    %310 = vector.extract_strided_slice %306 {offsets = [0, 192], sizes = [8, 64], strides = [1, 1]} : vector<8x256xf32> to vector<8x64xf32>
    %311 = arith.mulf %308, %289 : vector<8x64xf32>
    %312 = arith.mulf %307, %309 : vector<8x64xf32>
    %313 = arith.addf %311, %312 : vector<8x64xf32>
    %314 = math.tanh %313 : vector<8x64xf32>
    %315 = arith.mulf %310, %314 : vector<8x64xf32>
    %cst_56 = arith.constant 0.000000e+00 : f32
    %316 = vector.broadcast %cst_56 : f32 to vector<8x1xf32>
    %317 = arith.cmpf ogt, %297, %316 : vector<8x1xf32>
    %318 = arith.maximumf %295, %315 : vector<8x64xf32>
    %319 = vector.shape_cast %317 : vector<8x1xi1> to vector<8x1xi1>
    %320 = vector.broadcast %319 : vector<8x1xi1> to vector<8x64xi1>
    %321 = arith.select %320, %318, %295 : vector<8x64xi1>, vector<8x64xf32>
    %c0_57 = arith.constant 0 : index
    %c0_58 = arith.constant 0 : index
    %322 = vector.load %arg6[%c0_57, %c0_58] : memref<64x128xf32, #tpu.memory_space<vmem>>, vector<64x128xf32>
    %cst_59 = arith.constant dense<0.000000e+00> : vector<8x128xf32>
    %323 = tpu.matmul %321, %322, %cst_59 {dimension_numbers = #tpu.dot_dimension_numbers<[1], [0], [0], [1], [0, 0, 1, 1], [], []>} : vector<8x64xf32>, vector<64x128xf32>, vector<8x128xf32> -> vector<8x128xf32>
    %c0_60 = arith.constant 0 : index
    %c0_61 = arith.constant 0 : index
    %324 = vector.load %arg7[%c0_60, %c0_61] : memref<1x128xf32, #tpu.memory_space<vmem>>, vector<1x128xf32>
    %325 = vector.broadcast %324 : vector<1x128xf32> to vector<8x128xf32>
    %326 = arith.addf %323, %325 : vector<8x128xf32>
    %c0_62 = arith.constant 0 : index
    %c0_63 = arith.constant 0 : index
    %327 = vector.load %arg8[%c0_62, %c0_63] : memref<8x128xf32, #tpu.memory_space<vmem>>, vector<8x128xf32>
    tpu.vector_store %arg8[%c0_62, %c0_63], %326 {strides = array<i32>} : memref<8x128xf32, #tpu.memory_space<vmem>>, vector<8x128xf32>,
    return
  }
  func.func @transform_0(%arg0: i32) -> (i32, i32) {
    %c0_i32 = arith.constant 0 : i32
    %c0_i32_0 = arith.constant 0 : i32
    %c0_i32_1 = arith.constant 0 : i32
    return %c0_i32, %c0_i32_0 : i32, i32
  }
  func.func @transform_1(%arg0: i32) -> (i32, i32) {
    %c0_i32 = arith.constant 0 : i32
    %c0_i32_0 = arith.constant 0 : i32
    %c0_i32_1 = arith.constant 0 : i32
    return %c0_i32, %c0_i32_0 : i32, i32
  }
  func.func @transform_2(%arg0: i32) -> (i32, i32) {
    %c0_i32 = arith.constant 0 : i32
    %c0_i32_0 = arith.constant 0 : i32
    %c0_i32_1 = arith.constant 0 : i32
    return %c0_i32, %c0_i32_0 : i32, i32
  }
  func.func @transform_3(%arg0: i32) -> (i32, i32) {
    %c0_i32 = arith.constant 0 : i32
    %c0_i32_0 = arith.constant 0 : i32
    %c0_i32_1 = arith.constant 0 : i32
    return %c0_i32, %c0_i32_0 : i32, i32
  }
  func.func @transform_4(%arg0: i32) -> (i32, i32) {
    %c0_i32 = arith.constant 0 : i32
    %c0_i32_0 = arith.constant 0 : i32
    %c0_i32_1 = arith.constant 0 : i32
    return %c0_i32, %c0_i32_0 : i32, i32
  }
  func.func @transform_5(%arg0: i32) -> (i32, i32) {
    %c0_i32 = arith.constant 0 : i32
    %c0_i32_0 = arith.constant 0 : i32
    %c0_i32_1 = arith.constant 0 : i32
    return %c0_i32, %c0_i32_0 : i32, i32
  }
  func.func @transform_6(%arg0: i32) -> (i32, i32) {
    %c0_i32 = arith.constant 0 : i32
    %c0_i32_0 = arith.constant 0 : i32
    %c0_i32_1 = arith.constant 0 : i32
    return %c0_i32, %c0_i32_0 : i32, i32
  }
  func.func @transform_7(%arg0: i32) -> (i32, i32) {
    %c0_i32 = arith.constant 0 : i32
    %c0_i32_0 = arith.constant 0 : i32
    %c0_i32_1 = arith.constant 0 : i32
    return %c0_i32, %c0_i32_0 : i32, i32
  }
}

</mosaic_0001>

<llo_original>
// kernel: ehr_forward.2
$region0: #{ehr_forward.2}
  #allocation0 [shape = 'u32[]', space=smem, size = 0x4, offset = 0x4, fixed_abs, tag = 'smem constant byte address 0x4 - core index']
  #allocation1 [shape = 'u32[72,128]{1,0:T(1,128)}', space=vmem, size = 0x9000, scoped, tag = 'internal scratch']
  %s0 = inlined_call_operand.vmem [shape: f32[128,64], index: 0, kind: input, shape index: {}]
  %s1 = inlined_call_operand.vmem [shape: f32[32,32], index: 1, kind: input, shape index: {}]
  %s2 = inlined_call_operand.vmem [shape: f32[2,5,32], index: 2, kind: input, shape index: {}]
  %s3 = inlined_call_operand.vmem [shape: f32[64,64], index: 3, kind: input, shape index: {}]
  %s4 = inlined_call_operand.vmem [shape: f32[1,32], index: 4, kind: input, shape index: {}]
  %s5 = inlined_call_operand.vmem [shape: f32[1,32], index: 5, kind: input, shape index: {}]
  %s6 = inlined_call_operand.vmem [shape: f32[2,8,32], index: 6, kind: output, shape index: {}]
  %s7 = sld [smem:[#allocation0]]
  $region34: #{ehr_forward.2} parent=0
    _
  %s9 = ssub.s32 1, %s7
  %s10 = scalar_select 0, %s9, %s7
  // Predicated region
  $region2: #{ehr_forward.2} parent=0 // pred_check
    _
  $region3: #{ehr_forward.2} parent=0 // pred_check_branch
    %12 = sbr.rel (0) target = $region5
  $region4: #{ehr_forward.2} parent=0 // pred_region
    _
  $region5: #{ehr_forward.2} parent=0 // pred_fallthru
    _
  // Predicated region
  $region6: #{ehr_forward.2} parent=0 // pred_check
    _
  $region7: #{ehr_forward.2} parent=0 // pred_check_branch
    %14 = sbr.rel (0) target = $region9
  $region8: #{ehr_forward.2} parent=0 // pred_region
    _
  $region9: #{ehr_forward.2} parent=0 // pred_fallthru
    _
  // Predicated region
  $region10: #{ehr_forward.2} parent=0 // pred_check
    _
  $region11: #{ehr_forward.2} parent=0 // pred_check_branch
    %16 = sbr.rel (0) target = $region13
  $region12: #{ehr_forward.2} parent=0 // pred_region
    _
  $region13: #{ehr_forward.2} parent=0 // pred_fallthru
    _
  // Predicated region
  $region14: #{ehr_forward.2} parent=0 // pred_check
    _
  $region15: #{ehr_forward.2} parent=0 // pred_check_branch
    %18 = sbr.rel (0) target = $region17
  $region16: #{ehr_forward.2} parent=0 // pred_region
    _
  $region17: #{ehr_forward.2} parent=0 // pred_fallthru
    _
  // Predicated region
  $region18: #{ehr_forward.2} parent=0 // pred_check
    _
  $region19: #{ehr_forward.2} parent=0 // pred_check_branch
    %20 = sbr.rel (0) target = $region21
  $region20: #{ehr_forward.2} parent=0 // pred_region
    _
  $region21: #{ehr_forward.2} parent=0 // pred_fallthru
    _
  // Predicated region
  $region22: #{ehr_forward.2} parent=0 // pred_check
    _
  $region23: #{ehr_forward.2} parent=0 // pred_check_branch
    %22 = sbr.rel (0) target = $region25
  $region24: #{ehr_forward.2} parent=0 // pred_region
    _
  $region25: #{ehr_forward.2} parent=0 // pred_fallthru
    _
  %v23 = vld [vmem:[%s0] sm:$0xff]
  %v24 = vld [vmem:[%s0 + $0x8] sm:$0xff]
  %v25 = vld [vmem:[%s0 + $0x10] sm:$0xff]
  %v26 = vld [vmem:[%s0 + $0x18] sm:$0xff]
  %v27 = vld [vmem:[%s0 + $0x20] sm:$0xff]
  %v28 = vld [vmem:[%s0 + $0x28] sm:$0xff]
  %v29 = vld [vmem:[%s0 + $0x30] sm:$0xff]
  %v30 = vld [vmem:[%s0 + $0x38] sm:$0xff]
  %v31 = vld [vmem:[%s0 + $0x40] sm:$0xff]
  %v32 = vld [vmem:[%s0 + $0x48] sm:$0xff]
  %v33 = vld [vmem:[%s0 + $0x50] sm:$0xff]
  %v34 = vld [vmem:[%s0 + $0x58] sm:$0xff]
  %v35 = vld [vmem:[%s0 + $0x60] sm:$0xff]
  %v36 = vld [vmem:[%s0 + $0x68] sm:$0xff]
  %v37 = vld [vmem:[%s0 + $0x70] sm:$0xff]
  %v38 = vld [vmem:[%s0 + $0x78] sm:$0xff]
  %v39 = vld [vmem:[%s3] sm:$0xff]
  %v40 = vld [vmem:[%s3 + $0x8] sm:$0xff]
  %v41 = vld [vmem:[%s3 + $0x10] sm:$0xff]
  %v42 = vld [vmem:[%s3 + $0x18] sm:$0xff]
  %v43 = vld [vmem:[%s3 + $0x20] sm:$0xff]
  %v44 = vld [vmem:[%s3 + $0x28] sm:$0xff]
  %v45 = vld [vmem:[%s3 + $0x30] sm:$0xff]
  %v46 = vld [vmem:[%s3 + $0x38] sm:$0xff]
  %vm47 = vcmask 523264
  %v49 = vsel %vm47, %v23, 0
  %v52 = vsel %vm47, %v24, 0
  %v55 = vsel %vm47, %v25, 0
  %v58 = vsel %vm47, %v26, 0
  %v61 = vsel %vm47, %v27, 0
  %v64 = vsel %vm47, %v28, 0
  %v67 = vsel %vm47, %v29, 0
  %v70 = vsel %vm47, %v30, 0
  %v73 = vsel %vm47, %v31, 0
  %v76 = vsel %vm47, %v32, 0
  %v79 = vsel %vm47, %v33, 0
  %v82 = vsel %vm47, %v34, 0
  %v85 = vsel %vm47, %v35, 0
  %v88 = vsel %vm47, %v36, 0
  %v91 = vsel %vm47, %v37, 0
  %v94 = vsel %vm47, %v38, 0
  %96 = vmatpush.msra.mxu0 0.0
  %97 = vmatpush.msra.mxu0 0.0
  %98 = vmatpush.msra.mxu0 0.0
  %99 = vmatpush.msra.mxu0 0.0
  %100 = vmatpush.msra.mxu0 0.0
  %101 = vmatpush.msra.mxu0 0.0
  %102 = vmatpush.msra.mxu0 0.0
  %103 = vmatpush.msra.mxu0 0.0
  %104 = vmatpush.msra.mxu0 %v46
  %105 = vmatpush.msra.mxu0 %v45
  %106 = vmatpush.msra.mxu0 %v44
  %107 = vmatpush.msra.mxu0 %v43
  %108 = vmatpush.msra.mxu0 %v42
  %109 = vmatpush.msra.mxu0 %v41
  %110 = vmatpush.msra.mxu0 %v40
  %111 = vmatpush.msra.mxu0 %v39
  %112 = vmatmul.f32.gmra.mxu0 %v49
  %v113 = vpop.f32.mrf.mxu0
  %v114 = vadd.f32 0.0, %v113
  %115 = vmatmul.f32.gmra.mxu0 %v52
  %v116 = vpop.f32.mrf.mxu0
  %v117 = vadd.f32 0.0, %v116
  %118 = vmatmul.f32.gmra.mxu0 %v55
  %v119 = vpop.f32.mrf.mxu0
  %v120 = vadd.f32 0.0, %v119
  %121 = vmatmul.f32.gmra.mxu0 %v58
  %v122 = vpop.f32.mrf.mxu0
  %v123 = vadd.f32 0.0, %v122
  %124 = vmatmul.f32.gmra.mxu0 %v61
  %v125 = vpop.f32.mrf.mxu0
  %v126 = vadd.f32 0.0, %v125
  %127 = vmatmul.f32.gmra.mxu0 %v64
  %v128 = vpop.f32.mrf.mxu0
  %v129 = vadd.f32 0.0, %v128
  %130 = vmatmul.f32.gmra.mxu0 %v67
  %v131 = vpop.f32.mrf.mxu0
  %v132 = vadd.f32 0.0, %v131
  %133 = vmatmul.f32.gmra.mxu0 %v70
  %v134 = vpop.f32.mrf.mxu0
  %v135 = vadd.f32 0.0, %v134
  %136 = vmatmul.f32.gmra.mxu0 %v73
  %v137 = vpop.f32.mrf.mxu0
  %v138 = vadd.f32 0.0, %v137
  %139 = vmatmul.f32.gmra.mxu0 %v76
  %v140 = vpop.f32.mrf.mxu0
  %v141 = vadd.f32 0.0, %v140
  %142 = vmatmul.f32.gmra.mxu0 %v79
  %v143 = vpop.f32.mrf.mxu0
  %v144 = vadd.f32 0.0, %v143
  %145 = vmatmul.f32.gmra.mxu0 %v82
  %v146 = vpop.f32.mrf.mxu0
  %v147 = vadd.f32 0.0, %v146
  %148 = vmatmul.f32.gmra.mxu0 %v85
  %v149 = vpop.f32.mrf.mxu0
  %v150 = vadd.f32 0.0, %v149
  %151 = vmatmul.f32.gmra.mxu0 %v88
  %v152 = vpop.f32.mrf.mxu0
  %v153 = vadd.f32 0.0, %v152
  %154 = vmatmul.f32.gmra.mxu0 %v91
  %v155 = vpop.f32.mrf.mxu0
  %v156 = vadd.f32 0.0, %v155
  %157 = vmatmul.f32.gmra.mxu0 %v94
  %v158 = vpop.f32.mrf.mxu0
  %v159 = vadd.f32 0.0, %v158
  %160 = vdwg.mxu0
  %v169 = vrot.slane %v114, 4
  %v170 = vrot.slane %v117, 4
  %v171 = vrot.slane %v120, 4
  %v172 = vrot.slane %v123, 4
  %v173 = vrot.slane %v126, 4
  %v174 = vrot.slane %v129, 4
  %v175 = vrot.slane %v132, 4
  %v176 = vrot.slane %v135, 4
  %vm185 = vcmask 257024
  %v186 = vsel %vm185, %v114, -inf
  %v187 = vrot.slane %v186, 4
  %v188 = vmax.f32 %v186, %v187
  %v189 = vrot.slane %v188, 2
  %v190 = vmax.f32 %v188, %v189
  %v191 = vrot.slane %v190, 1
  %v192 = vmax.f32 %v190, %v191
  %v193 = vsel %vm185, %v169, -inf
  %v194 = vrot.slane %v193, 4
  %v195 = vmax.f32 %v193, %v194
  %v196 = vrot.slane %v195, 2
  %v197 = vmax.f32 %v195, %v196
  %v198 = vrot.slane %v197, 1
  %v199 = vmax.f32 %v197, %v198
  %v200 = vsel %vm185, %v117, -inf
  %v201 = vrot.slane %v200, 4
  %v202 = vmax.f32 %v200, %v201
  %v203 = vrot.slane %v202, 2
  %v204 = vmax.f32 %v202, %v203
  %v205 = vrot.slane %v204, 1
  %v206 = vmax.f32 %v204, %v205
  %v207 = vsel %vm185, %v170, -inf
  %v208 = vrot.slane %v207, 4
  %v209 = vmax.f32 %v207, %v208
  %v210 = vrot.slane %v209, 2
  %v211 = vmax.f32 %v209, %v210
  %v212 = vrot.slane %v211, 1
  %v213 = vmax.f32 %v211, %v212
  %v214 = vsel %vm185, %v120, -inf
  %v215 = vrot.slane %v214, 4
  %v216 = vmax.f32 %v214, %v215
  %v217 = vrot.slane %v216, 2
  %v218 = vmax.f32 %v216, %v217
  %v219 = vrot.slane %v218, 1
  %v220 = vmax.f32 %v218, %v219
  %v221 = vsel %vm185, %v171, -inf
  %v222 = vrot.slane %v221, 4
  %v223 = vmax.f32 %v221, %v222
  %v224 = vrot.slane %v223, 2
  %v225 = vmax.f32 %v223, %v224
  %v226 = vrot.slane %v225, 1
  %v227 = vmax.f32 %v225, %v226
  %v228 = vsel %vm185, %v123, -inf
  %v229 = vrot.slane %v228, 4
  %v230 = vmax.f32 %v228, %v229
  %v231 = vrot.slane %v230, 2
  %v232 = vmax.f32 %v230, %v231
  %v233 = vrot.slane %v232, 1
  %v234 = vmax.f32 %v232, %v233
  %v235 = vsel %vm185, %v172, -inf
  %v236 = vrot.slane %v235, 4
  %v237 = vmax.f32 %v235, %v236
  %v238 = vrot.slane %v237, 2
  %v239 = vmax.f32 %v237, %v238
  %v240 = vrot.slane %v239, 1
  %v241 = vmax.f32 %v239, %v240
  %v242 = vsel %vm185, %v126, -inf
  %v243 = vrot.slane %v242, 4
  %v244 = vmax.f32 %v242, %v243
  %v245 = vrot.slane %v244, 2
  %v246 = vmax.f32 %v244, %v245
  %v247 = vrot.slane %v246, 1
  %v248 = vmax.f32 %v246, %v247
  %v249 = vsel %vm185, %v173, -inf
  %v250 = vrot.slane %v249, 4
  %v251 = vmax.f32 %v249, %v250
  %v252 = vrot.slane %v251, 2
  %v253 = vmax.f32 %v251, %v252
  %v254 = vrot.slane %v253, 1
  %v255 = vmax.f32 %v253, %v254
  %v256 = vsel %vm185, %v129, -inf
  %v257 = vrot.slane %v256, 4
  %v258 = vmax.f32 %v256, %v257
  %v259 = vrot.slane %v258, 2
  %v260 = vmax.f32 %v258, %v259
  %v261 = vrot.slane %v260, 1
  %v262 = vmax.f32 %v260, %v261
  %v263 = vsel %vm185, %v174, -inf
  %v264 = vrot.slane %v263, 4
  %v265 = vmax.f32 %v263, %v264
  %v266 = vrot.slane %v265, 2
  %v267 = vmax.f32 %v265, %v266
  %v268 = vrot.slane %v267, 1
  %v269 = vmax.f32 %v267, %v268
  %v270 = vsel %vm185, %v132, -inf
  %v271 = vrot.slane %v270, 4
  %v272 = vmax.f32 %v270, %v271
  %v273 = vrot.slane %v272, 2
  %v274 = vmax.f32 %v272, %v273
  %v275 = vrot.slane %v274, 1
  %v276 = vmax.f32 %v274, %v275
  %v277 = vsel %vm185, %v175, -inf
  %v278 = vrot.slane %v277, 4
  %v279 = vmax.f32 %v277, %v278
  %v280 = vrot.slane %v279, 2
  %v281 = vmax.f32 %v279, %v280
  %v282 = vrot.slane %v281, 1
  %v283 = vmax.f32 %v281, %v282
  %v284 = vsel %vm185, %v135, -inf
  %v285 = vrot.slane %v284, 4
  %v286 = vmax.f32 %v284, %v285
  %v287 = vrot.slane %v286, 2
  %v288 = vmax.f32 %v286, %v287
  %v289 = vrot.slane %v288, 1
  %v290 = vmax.f32 %v288, %v289
  %v291 = vsel %vm185, %v176, -inf
  %v292 = vrot.slane %v291, 4
  %v293 = vmax.f32 %v291, %v292
  %v294 = vrot.slane %v293, 2
  %v295 = vmax.f32 %v293, %v294
  %v296 = vrot.slane %v295, 1
  %v297 = vmax.f32 %v295, %v296
  %v298 = vld [vmem:[%s4] sm:$0x1]
  %v300 = vperm.slane %v298, 0
  %v302 = vadd.f32 %v192, %v300
  %v303 = vadd.f32 %v199, %v300
  %v304 = vadd.f32 %v206, %v300
  %v305 = vadd.f32 %v213, %v300
  %v306 = vadd.f32 %v220, %v300
  %v307 = vadd.f32 %v227, %v300
  %v308 = vadd.f32 %v234, %v300
  %v309 = vadd.f32 %v241, %v300
  %v310 = vadd.f32 %v248, %v300
  %v311 = vadd.f32 %v255, %v300
  %v312 = vadd.f32 %v262, %v300
  %v313 = vadd.f32 %v269, %v300
  %v314 = vadd.f32 %v276, %v300
  %v315 = vadd.f32 %v283, %v300
  %v316 = vadd.f32 %v290, %v300
  %v317 = vadd.f32 %v297, %v300
  %v326 = vrot.slane %v138, 4
  %v327 = vrot.slane %v141, 4
  %v328 = vrot.slane %v144, 4
  %v329 = vrot.slane %v147, 4
  %v330 = vrot.slane %v150, 4
  %v331 = vrot.slane %v153, 4
  %v332 = vrot.slane %v156, 4
  %v333 = vrot.slane %v159, 4
  %vm342 = vcmask 519424
  %v343 = vsel %vm342, %v138, -inf
  %v344 = vrot.slane %v343, 4
  %v345 = vmax.f32 %v343, %v344
  %v346 = vrot.slane %v345, 2
  %v347 = vmax.f32 %v345, %v346
  %v348 = vrot.slane %v347, 1
  %v349 = vmax.f32 %v347, %v348
  %v350 = vsel %vm342, %v326, -inf
  %v351 = vrot.slane %v350, 4
  %v352 = vmax.f32 %v350, %v351
  %v353 = vrot.slane %v352, 2
  %v354 = vmax.f32 %v352, %v353
  %v355 = vrot.slane %v354, 1
  %v356 = vmax.f32 %v354, %v355
  %v357 = vsel %vm342, %v141, -inf
  %v358 = vrot.slane %v357, 4
  %v359 = vmax.f32 %v357, %v358
  %v360 = vrot.slane %v359, 2
  %v361 = vmax.f32 %v359, %v360
  %v362 = vrot.slane %v361, 1
  %v363 = vmax.f32 %v361, %v362
  %v364 = vsel %vm342, %v327, -inf
  %v365 = vrot.slane %v364, 4
  %v366 = vmax.f32 %v364, %v365
  %v367 = vrot.slane %v366, 2
  %v368 = vmax.f32 %v366, %v367
  %v369 = vrot.slane %v368, 1
  %v370 = vmax.f32 %v368, %v369
  %v371 = vsel %vm342, %v144, -inf
  %v372 = vrot.slane %v371, 4
  %v373 = vmax.f32 %v371, %v372
  %v374 = vrot.slane %v373, 2
  %v375 = vmax.f32 %v373, %v374
  %v376 = vrot.slane %v375, 1
  %v377 = vmax.f32 %v375, %v376
  %v378 = vsel %vm342, %v328, -inf
  %v379 = vrot.slane %v378, 4
  %v380 = vmax.f32 %v378, %v379
  %v381 = vrot.slane %v380, 2
  %v382 = vmax.f32 %v380, %v381
  %v383 = vrot.slane %v382, 1
  %v384 = vmax.f32 %v382, %v383
  %v385 = vsel %vm342, %v147, -inf
  %v386 = vrot.slane %v385, 4
  %v387 = vmax.f32 %v385, %v386
  %v388 = vrot.slane %v387, 2
  %v389 = vmax.f32 %v387, %v388
  %v390 = vrot.slane %v389, 1
  %v391 = vmax.f32 %v389, %v390
  %v392 = vsel %vm342, %v329, -inf
  %v393 = vrot.slane %v392, 4
  %v394 = vmax.f32 %v392, %v393
  %v395 = vrot.slane %v394, 2
  %v396 = vmax.f32 %v394, %v395
  %v397 = vrot.slane %v396, 1
  %v398 = vmax.f32 %v396, %v397
  %v399 = vsel %vm342, %v150, -inf
  %v400 = vrot.slane %v399, 4
  %v401 = vmax.f32 %v399, %v400
  %v402 = vrot.slane %v401, 2
  %v403 = vmax.f32 %v401, %v402
  %v404 = vrot.slane %v403, 1
  %v405 = vmax.f32 %v403, %v404
  %v406 = vsel %vm342, %v330, -inf
  %v407 = vrot.slane %v406, 4
  %v408 = vmax.f32 %v406, %v407
  %v409 = vrot.slane %v408, 2
  %v410 = vmax.f32 %v408, %v409
  %v411 = vrot.slane %v410, 1
  %v412 = vmax.f32 %v410, %v411
  %v413 = vsel %vm342, %v153, -inf
  %v414 = vrot.slane %v413, 4
  %v415 = vmax.f32 %v413, %v414
  %v416 = vrot.slane %v415, 2
  %v417 = vmax.f32 %v415, %v416
  %v418 = vrot.slane %v417, 1
  %v419 = vmax.f32 %v417, %v418
  %v420 = vsel %vm342, %v331, -inf
  %v421 = vrot.slane %v420, 4
  %v422 = vmax.f32 %v420, %v421
  %v423 = vrot.slane %v422, 2
  %v424 = vmax.f32 %v422, %v423
  %v425 = vrot.slane %v424, 1
  %v426 = vmax.f32 %v424, %v425
  %v427 = vsel %vm342, %v156, -inf
  %v428 = vrot.slane %v427, 4
  %v429 = vmax.f32 %v427, %v428
  %v430 = vrot.slane %v429, 2
  %v431 = vmax.f32 %v429, %v430
  %v432 = vrot.slane %v431, 1
  %v433 = vmax.f32 %v431, %v432
  %v434 = vsel %vm342, %v332, -inf
  %v435 = vrot.slane %v434, 4
  %v436 = vmax.f32 %v434, %v435
  %v437 = vrot.slane %v436, 2
  %v438 = vmax.f32 %v436, %v437
  %v439 = vrot.slane %v438, 1
  %v440 = vmax.f32 %v438, %v439
  %v441 = vsel %vm342, %v159, -inf
  %v442 = vrot.slane %v441, 4
  %v443 = vmax.f32 %v441, %v442
  %v444 = vrot.slane %v443, 2
  %v445 = vmax.f32 %v443, %v444
  %v446 = vrot.slane %v445, 1
  %v447 = vmax.f32 %v445, %v446
  %v448 = vsel %vm342, %v333, -inf
  %v449 = vrot.slane %v448, 4
  %v450 = vmax.f32 %v448, %v449
  %v451 = vrot.slane %v450, 2
  %v452 = vmax.f32 %v450, %v451
  %v453 = vrot.slane %v452, 1
  %v454 = vmax.f32 %v452, %v453
  %v455 = vld [vmem:[%s5] sm:$0x1]
  %v457 = vperm.slane %v455, 0
  %458 = vrot.lane.b32.xlu0 %v457, 32
  %v459 = vpop.permute.xlu0 %458
  %v461 = vadd.f32 %v349, %v459
  %v462 = vadd.f32 %v356, %v459
  %v463 = vadd.f32 %v363, %v459
  %v464 = vadd.f32 %v370, %v459
  %v465 = vadd.f32 %v377, %v459
  %v466 = vadd.f32 %v384, %v459
  %v467 = vadd.f32 %v391, %v459
  %v468 = vadd.f32 %v398, %v459
  %v469 = vadd.f32 %v405, %v459
  %v470 = vadd.f32 %v412, %v459
  %v471 = vadd.f32 %v419, %v459
  %v472 = vadd.f32 %v426, %v459
  %v473 = vadd.f32 %v433, %v459
  %v474 = vadd.f32 %v440, %v459
  %v475 = vadd.f32 %v447, %v459
  %v476 = vadd.f32 %v454, %v459
  %v477 = vld [vmem:[%s1] sm:$0xff]
  %v478 = vld [vmem:[%s1 + $0x8] sm:$0xff]
  %v479 = vld [vmem:[%s1 + $0x10] sm:$0xff]
  %v480 = vld [vmem:[%s1 + $0x18] sm:$0xff]
  %v485 = vrot.slane %v477, 2
  %v486 = vrot.slane %v477, 4
  %v487 = vrot.slane %v477, 6
  %v488 = vrot.slane %v478, 2
  %v489 = vrot.slane %v478, 4
  %v490 = vrot.slane %v478, 6
  %v491 = vrot.slane %v479, 2
  %v492 = vrot.slane %v479, 4
  %v493 = vrot.slane %v479, 6
  %v494 = vrot.slane %v480, 2
  %v495 = vrot.slane %v480, 4
  %v496 = vrot.slane %v480, 6
  %vm509 = vcmask 254976
  %v510 = vsel %vm509, %v477, -inf
  %v511 = vrot.slane %v510, 4
  %v512 = vmax.f32 %v510, %v511
  %v513 = vrot.slane %v512, 2
  %v514 = vmax.f32 %v512, %v513
  %v515 = vrot.slane %v514, 1
  %v516 = vmax.f32 %v514, %v515
  %v517 = vsel %vm509, %v485, -inf
  %v518 = vrot.slane %v517, 4
  %v519 = vmax.f32 %v517, %v518
  %v520 = vrot.slane %v519, 2
  %v521 = vmax.f32 %v519, %v520
  %v522 = vrot.slane %v521, 1
  %v523 = vmax.f32 %v521, %v522
  %v524 = vsel %vm509, %v486, -inf
  %v525 = vrot.slane %v524, 4
  %v526 = vmax.f32 %v524, %v525
  %v527 = vrot.slane %v526, 2
  %v528 = vmax.f32 %v526, %v527
  %v529 = vrot.slane %v528, 1
  %v530 = vmax.f32 %v528, %v529
  %v531 = vsel %vm509, %v487, -inf
  %v532 = vrot.slane %v531, 4
  %v533 = vmax.f32 %v531, %v532
  %v534 = vrot.slane %v533, 2
  %v535 = vmax.f32 %v533, %v534
  %v536 = vrot.slane %v535, 1
  %v537 = vmax.f32 %v535, %v536
  %v538 = vsel %vm509, %v478, -inf
  %v539 = vrot.slane %v538, 4
  %v540 = vmax.f32 %v538, %v539
  %v541 = vrot.slane %v540, 2
  %v542 = vmax.f32 %v540, %v541
  %v543 = vrot.slane %v542, 1
  %v544 = vmax.f32 %v542, %v543
  %v545 = vsel %vm509, %v488, -inf
  %v546 = vrot.slane %v545, 4
  %v547 = vmax.f32 %v545, %v546
  %v548 = vrot.slane %v547, 2
  %v549 = vmax.f32 %v547, %v548
  %v550 = vrot.slane %v549, 1
  %v551 = vmax.f32 %v549, %v550
  %v552 = vsel %vm509, %v489, -inf
  %v553 = vrot.slane %v552, 4
  %v554 = vmax.f32 %v552, %v553
  %v555 = vrot.slane %v554, 2
  %v556 = vmax.f32 %v554, %v555
  %v557 = vrot.slane %v556, 1
  %v558 = vmax.f32 %v556, %v557
  %v559 = vsel %vm509, %v490, -inf
  %v560 = vrot.slane %v559, 4
  %v561 = vmax.f32 %v559, %v560
  %v562 = vrot.slane %v561, 2
  %v563 = vmax.f32 %v561, %v562
  %v564 = vrot.slane %v563, 1
  %v565 = vmax.f32 %v563, %v564
  %v566 = vsel %vm509, %v479, -inf
  %v567 = vrot.slane %v566, 4
  %v568 = vmax.f32 %v566, %v567
  %v569 = vrot.slane %v568, 2
  %v570 = vmax.f32 %v568, %v569
  %v571 = vrot.slane %v570, 1
  %v572 = vmax.f32 %v570, %v571
  %v573 = vsel %vm509, %v491, -inf
  %v574 = vrot.slane %v573, 4
  %v575 = vmax.f32 %v573, %v574
  %v576 = vrot.slane %v575, 2
  %v577 = vmax.f32 %v575, %v576
  %v578 = vrot.slane %v577, 1
  %v579 = vmax.f32 %v577, %v578
  %v580 = vsel %vm509, %v492, -inf
  %v581 = vrot.slane %v580, 4
  %v582 = vmax.f32 %v580, %v581
  %v583 = vrot.slane %v582, 2
  %v584 = vmax.f32 %v582, %v583
  %v585 = vrot.slane %v584, 1
  %v586 = vmax.f32 %v584, %v585
  %v587 = vsel %vm509, %v493, -inf
  %v588 = vrot.slane %v587, 4
  %v589 = vmax.f32 %v587, %v588
  %v590 = vrot.slane %v589, 2
  %v591 = vmax.f32 %v589, %v590
  %v592 = vrot.slane %v591, 1
  %v593 = vmax.f32 %v591, %v592
  %v594 = vsel %vm509, %v480, -inf
  %v595 = vrot.slane %v594, 4
  %v596 = vmax.f32 %v594, %v595
  %v597 = vrot.slane %v596, 2
  %v598 = vmax.f32 %v596, %v597
  %v599 = vrot.slane %v598, 1
  %v600 = vmax.f32 %v598, %v599
  %v601 = vsel %vm509, %v494, -inf
  %v602 = vrot.slane %v601, 4
  %v603 = vmax.f32 %v601, %v602
  %v604 = vrot.slane %v603, 2
  %v605 = vmax.f32 %v603, %v604
  %v606 = vrot.slane %v605, 1
  %v607 = vmax.f32 %v605, %v606
  %v608 = vsel %vm509, %v495, -inf
  %v609 = vrot.slane %v608, 4
  %v610 = vmax.f32 %v608, %v609
  %v611 = vrot.slane %v610, 2
  %v612 = vmax.f32 %v610, %v611
  %v613 = vrot.slane %v612, 1
  %v614 = vmax.f32 %v612, %v613
  %v615 = vsel %vm509, %v496, -inf
  %v616 = vrot.slane %v615, 4
  %v617 = vmax.f32 %v615, %v616
  %v618 = vrot.slane %v617, 2
  %v619 = vmax.f32 %v617, %v618
  %v620 = vrot.slane %v619, 1
  %v621 = vmax.f32 %v619, %v620
  %v622 = vld [vmem:[%s2] sm:$0x1f]
  %v623 = vld [vmem:[%s2 + $0x8] sm:$0x1f]
  %vm624 = vcmask 258048
  %v625 = vsel %vm624, %v622, -inf
  %v626 = vrot.slane %v625, 4
  %v627 = vmax.f32 %v625, %v626
  %v628 = vrot.slane %v627, 2
  %v629 = vmax.f32 %v627, %v628
  %v630 = vrot.slane %v629, 1
  %v631 = vmax.f32 %v629, %v630
  %v632 = vsel %vm624, %v623, -inf
  %v633 = vrot.slane %v632, 4
  %v634 = vmax.f32 %v632, %v633
  %v635 = vrot.slane %v634, 2
  %v636 = vmax.f32 %v634, %v635
  %v637 = vrot.slane %v636, 1
  %v638 = vmax.f32 %v636, %v637
  %655 = vrot.lane.b32.xlu0 %v461, 96
  %v656 = vpop.permute.xlu0 %655
  %657 = vrot.lane.b32.xlu0 %v462, 96
  %v658 = vpop.permute.xlu0 %657
  %659 = vrot.lane.b32.xlu0 %v463, 96
  %v660 = vpop.permute.xlu0 %659
  %661 = vrot.lane.b32.xlu0 %v464, 96
  %v662 = vpop.permute.xlu0 %661
  %663 = vrot.lane.b32.xlu0 %v465, 96
  %v664 = vpop.permute.xlu0 %663
  %665 = vrot.lane.b32.xlu0 %v466, 96
  %v666 = vpop.permute.xlu0 %665
  %667 = vrot.lane.b32.xlu0 %v467, 96
  %v668 = vpop.permute.xlu0 %667
  %669 = vrot.lane.b32.xlu0 %v468, 96
  %v670 = vpop.permute.xlu0 %669
  %671 = vrot.lane.b32.xlu0 %v469, 96
  %v672 = vpop.permute.xlu0 %671
  %673 = vrot.lane.b32.xlu0 %v470, 96
  %v674 = vpop.permute.xlu0 %673
  %675 = vrot.lane.b32.xlu0 %v471, 96
  %v676 = vpop.permute.xlu0 %675
  %677 = vrot.lane.b32.xlu0 %v472, 96
  %v678 = vpop.permute.xlu0 %677
  %679 = vrot.lane.b32.xlu0 %v473, 96
  %v680 = vpop.permute.xlu0 %679
  %681 = vrot.lane.b32.xlu0 %v474, 96
  %v682 = vpop.permute.xlu0 %681
  %683 = vrot.lane.b32.xlu0 %v475, 96
  %v684 = vpop.permute.xlu0 %683
  %685 = vrot.lane.b32.xlu0 %v476, 96
  %v686 = vpop.permute.xlu0 %685
  %v703 = vmax.f32 %v302, %v656
  %v704 = vmax.f32 %v303, %v658
  %v705 = vmax.f32 %v304, %v660
  %v706 = vmax.f32 %v305, %v662
  %v707 = vmax.f32 %v306, %v664
  %v708 = vmax.f32 %v307, %v666
  %v709 = vmax.f32 %v308, %v668
  %v710 = vmax.f32 %v309, %v670
  %v711 = vmax.f32 %v310, %v672
  %v712 = vmax.f32 %v311, %v674
  %v713 = vmax.f32 %v312, %v676
  %v714 = vmax.f32 %v313, %v678
  %v715 = vmax.f32 %v314, %v680
  %v716 = vmax.f32 %v315, %v682
  %v717 = vmax.f32 %v316, %v684
  %v718 = vmax.f32 %v317, %v686
  %v719 = vmax.f32 %v703, %v516
  %v720 = vmax.f32 %v704, %v523
  %v721 = vmax.f32 %v705, %v530
  %v722 = vmax.f32 %v706, %v537
  %v723 = vmax.f32 %v707, %v544
  %v724 = vmax.f32 %v708, %v551
  %v725 = vmax.f32 %v709, %v558
  %v726 = vmax.f32 %v710, %v565
  %v727 = vmax.f32 %v711, %v572
  %v728 = vmax.f32 %v712, %v579
  %v729 = vmax.f32 %v713, %v586
  %v730 = vmax.f32 %v714, %v593
  %v731 = vmax.f32 %v715, %v600
  %v732 = vmax.f32 %v716, %v607
  %v733 = vmax.f32 %v717, %v614
  %v734 = vmax.f32 %v718, %v621
  %v735 = vmax.f32 %v719, %v631
  %v736 = vmax.f32 %v720, %v631
  %v737 = vmax.f32 %v721, %v631
  %v738 = vmax.f32 %v722, %v631
  %v739 = vmax.f32 %v723, %v631
  %v740 = vmax.f32 %v724, %v631
  %v741 = vmax.f32 %v725, %v631
  %v742 = vmax.f32 %v726, %v631
  %v743 = vmax.f32 %v727, %v638
  %v744 = vmax.f32 %v728, %v638
  %v745 = vmax.f32 %v729, %v638
  %v746 = vmax.f32 %v730, %v638
  %v747 = vmax.f32 %v731, %v638
  %v748 = vmax.f32 %v732, %v638
  %v749 = vmax.f32 %v733, %v638
  %v750 = vmax.f32 %v734, %v638
  %v767 = vrot.slane %v736, 7
  %vm768 = vcmask 1041409
  %v769 = vsel %vm768, %v767, %v735
  %v770 = vrot.slane %v737, 6
  %vm771 = vcmask 1042434
  %v772 = vsel %vm771, %v770, %v769
  %v773 = vrot.slane %v738, 5
  %vm774 = vcmask 1043459
  %v775 = vsel %vm774, %v773, %v772
  %v776 = vrot.slane %v739, 4
  %vm777 = vcmask 1044484
  %v778 = vsel %vm777, %v776, %v775
  %v779 = vrot.slane %v740, 3
  %vm780 = vcmask 1045509
  %v781 = vsel %vm780, %v779, %v778
  %v782 = vrot.slane %v741, 2
  %vm783 = vcmask 1046534
  %v784 = vsel %vm783, %v782, %v781
  %v785 = vrot.slane %v742, 1
  %vm786 = vcmask 1047559
  %v787 = vsel %vm786, %v785, %v784
  %v788 = vrot.slane %v744, 7
  %v789 = vsel %vm768, %v788, %v743
  %v790 = vrot.slane %v745, 6
  %v791 = vsel %vm771, %v790, %v789
  %v792 = vrot.slane %v746, 5
  %v793 = vsel %vm774, %v792, %v791
  %v794 = vrot.slane %v747, 4
  %v795 = vsel %vm777, %v794, %v793
  %v796 = vrot.slane %v748, 3
  %v797 = vsel %vm780, %v796, %v795
  %v798 = vrot.slane %v749, 2
  %v799 = vsel %vm783, %v798, %v797
  %v800 = vrot.slane %v750, 1
  %v801 = vsel %vm786, %v800, %v799
  %vm804 = vcmask 261120
  %805 = vst.msk [vmem:[%s6] sm:$0xff] %vm804, %v787
  %806 = vst.msk [vmem:[%s6 + $0x8] sm:$0xff] %vm804, %v801
  // Predicated region
  $region26: #{ehr_forward.2} parent=0 // pred_check
    _
  $region27: #{ehr_forward.2} parent=0 // pred_check_branch
    %808 = sbr.rel (0) target = $region29
  $region28: #{ehr_forward.2} parent=0 // pred_region
    _
  $region29: #{ehr_forward.2} parent=0 // pred_fallthru
    _
  // Predicated region
  $region30: #{ehr_forward.2} parent=0 // pred_check
    _
  $region31: #{ehr_forward.2} parent=0 // pred_check_branch
    %810 = sbr.rel (0) target = $region33
  $region32: #{ehr_forward.2} parent=0 // pred_region
    _
  $region33: #{ehr_forward.2} parent=0 // pred_fallthru
    _

// kernel: ehr_forward.3
$region0: #{ehr_forward.3}
  #allocation0 [shape = 'u32[]', space=smem, size = 0x4, offset = 0x4, fixed_abs, tag = 'smem constant byte address 0x4 - core index']
  #allocation1 [shape = 'u32[72,128]{1,0:T(1,128)}', space=vmem, size = 0x9000, scoped, tag = 'internal scratch']
  %s0 = inlined_call_operand.vmem [shape: f32[64,128], index: 0, kind: input, shape index: {}]
  %s1 = inlined_call_operand.vmem [shape: f32[64,1], index: 1, kind: input, shape index: {}]
  %s2 = inlined_call_operand.vmem [shape: f32[128,256], index: 2, kind: input, shape index: {}]
  %s3 = inlined_call_operand.vmem [shape: f32[64,256], index: 3, kind: input, shape index: {}]
  %s4 = inlined_call_operand.vmem [shape: f32[1,256], index: 4, kind: input, shape index: {}]
  %s5 = inlined_call_operand.vmem [shape: f32[64,128], index: 5, kind: input, shape index: {}]
  %s6 = inlined_call_operand.vmem [shape: f32[1,128], index: 6, kind: input, shape index: {}]
  %s7 = inlined_call_operand.vmem [shape: f32[8,128], index: 7, kind: output, shape index: {}]
  %s8 = sld [smem:[#allocation0]]
  $region38: #{ehr_forward.3} parent=0
    _
  %s10 = ssub.s32 1, %s8
  %s11 = scalar_select 0, %s10, %s8
  // Predicated region
  $region2: #{ehr_forward.3} parent=0 // pred_check
    _
  $region3: #{ehr_forward.3} parent=0 // pred_check_branch
    %13 = sbr.rel (0) target = $region5
  $region4: #{ehr_forward.3} parent=0 // pred_region
    _
  $region5: #{ehr_forward.3} parent=0 // pred_fallthru
    _
  // Predicated region
  $region6: #{ehr_forward.3} parent=0 // pred_check
    _
  $region7: #{ehr_forward.3} parent=0 // pred_check_branch
    %15 = sbr.rel (0) target = $region9
  $region8: #{ehr_forward.3} parent=0 // pred_region
    _
  $region9: #{ehr_forward.3} parent=0 // pred_fallthru
    _
  // Predicated region
  $region10: #{ehr_forward.3} parent=0 // pred_check
    _
  $region11: #{ehr_forward.3} parent=0 // pred_check_branch
    %17 = sbr.rel (0) target = $region13
  $region12: #{ehr_forward.3} parent=0 // pred_region
    _
  $region13: #{ehr_forward.3} parent=0 // pred_fallthru
    _
  // Predicated region
  $region14: #{ehr_forward.3} parent=0 // pred_check
    _
  $region15: #{ehr_forward.3} parent=0 // pred_check_branch
    %19 = sbr.rel (0) target = $region17
  $region16: #{ehr_forward.3} parent=0 // pred_region
    _
  $region17: #{ehr_forward.3} parent=0 // pred_fallthru
    _
  // Predicated region
  $region18: #{ehr_forward.3} parent=0 // pred_check
    _
  $region19: #{ehr_forward.3} parent=0 // pred_check_branch
    %21 = sbr.rel (0) target = $region21
  $region20: #{ehr_forward.3} parent=0 // pred_region
    _
  $region21: #{ehr_forward.3} parent=0 // pred_fallthru
    _
  // Predicated region
  $region22: #{ehr_forward.3} parent=0 // pred_check
    _
  $region23: #{ehr_forward.3} parent=0 // pred_check_branch
    %23 = sbr.rel (0) target = $region25
  $region24: #{ehr_forward.3} parent=0 // pred_region
    _
  $region25: #{ehr_forward.3} parent=0 // pred_fallthru
    _
  // Predicated region
  $region26: #{ehr_forward.3} parent=0 // pred_check
    _
  $region27: #{ehr_forward.3} parent=0 // pred_check_branch
    %25 = sbr.rel (0) target = $region29
  $region28: #{ehr_forward.3} parent=0 // pred_region
    _
  $region29: #{ehr_forward.3} parent=0 // pred_fallthru
    _
  %v26 = vld [vmem:[%s0] sm:$0xff]
  %v27 = vld [vmem:[%s0 + $0x8] sm:$0xff]
  %v28 = vld [vmem:[%s0 + $0x10] sm:$0xff]
  %v29 = vld [vmem:[%s0 + $0x18] sm:$0xff]
  %v30 = vld [vmem:[%s0 + $0x20] sm:$0xff]
  %v31 = vld [vmem:[%s0 + $0x28] sm:$0xff]
  %v32 = vld [vmem:[%s0 + $0x30] sm:$0xff]
  %v33 = vld [vmem:[%s0 + $0x38] sm:$0xff]
  %v34 = vld [vmem:[%s2] sm:$0xff]
  %v35 = vld [vmem:[%s2 + $0x8] sm:$0xff]
  %v36 = vld [vmem:[%s2 + $0x10] sm:$0xff]
  %v37 = vld [vmem:[%s2 + $0x18] sm:$0xff]
  %v38 = vld [vmem:[%s2 + $0x20] sm:$0xff]
  %v39 = vld [vmem:[%s2 + $0x28] sm:$0xff]
  %v40 = vld [vmem:[%s2 + $0x30] sm:$0xff]
  %v41 = vld [vmem:[%s2 + $0x38] sm:$0xff]
  %v42 = vld [vmem:[%s2 + $0x40] sm:$0xff]
  %v43 = vld [vmem:[%s2 + $0x48] sm:$0xff]
  %v44 = vld [vmem:[%s2 + $0x50] sm:$0xff]
  %v45 = vld [vmem:[%s2 + $0x58] sm:$0xff]
  %v46 = vld [vmem:[%s2 + $0x60] sm:$0xff]
  %v47 = vld [vmem:[%s2 + $0x68] sm:$0xff]
  %v48 = vld [vmem:[%s2 + $0x70] sm:$0xff]
  %v49 = vld [vmem:[%s2 + $0x78] sm:$0xff]
  %v50 = vld [vmem:[%s2 + $0x80] sm:$0xff]
  %v51 = vld [vmem:[%s2 + $0x88] sm:$0xff]
  %v52 = vld [vmem:[%s2 + $0x90] sm:$0xff]
  %v53 = vld [vmem:[%s2 + $0x98] sm:$0xff]
  %v54 = vld [vmem:[%s2 + $0xa0] sm:$0xff]
  %v55 = vld [vmem:[%s2 + $0xa8] sm:$0xff]
  %v56 = vld [vmem:[%s2 + $0xb0] sm:$0xff]
  %v57 = vld [vmem:[%s2 + $0xb8] sm:$0xff]
  %v58 = vld [vmem:[%s2 + $0xc0] sm:$0xff]
  %v59 = vld [vmem:[%s2 + $0xc8] sm:$0xff]
  %v60 = vld [vmem:[%s2 + $0xd0] sm:$0xff]
  %v61 = vld [vmem:[%s2 + $0xd8] sm:$0xff]
  %v62 = vld [vmem:[%s2 + $0xe0] sm:$0xff]
  %v63 = vld [vmem:[%s2 + $0xe8] sm:$0xff]
  %v64 = vld [vmem:[%s2 + $0xf0] sm:$0xff]
  %v65 = vld [vmem:[%s2 + $0xf8] sm:$0xff]
  %v66 = vld [vmem:[%s4] sm:$0x3]
  %v68 = vperm.slane %v66, 0
  %v69 = vperm.slane %v66, 1
  %72 = vmatpush.msra.mxu0 %v64
  %73 = vmatpush.msra.mxu0 %v62
  %74 = vmatpush.msra.mxu0 %v60
  %75 = vmatpush.msra.mxu0 %v58
  %76 = vmatpush.msra.mxu0 %v56
  %77 = vmatpush.msra.mxu0 %v54
  %78 = vmatpush.msra.mxu0 %v52
  %79 = vmatpush.msra.mxu0 %v50
  %80 = vmatpush.msra.mxu0 %v48
  %81 = vmatpush.msra.mxu0 %v46
  %82 = vmatpush.msra.mxu0 %v44
  %83 = vmatpush.msra.mxu0 %v42
  %84 = vmatpush.msra.mxu0 %v40
  %85 = vmatpush.msra.mxu0 %v38
  %86 = vmatpush.msra.mxu0 %v36
  %87 = vmatpush.msra.mxu0 %v34
  %88 = vmatmul.f32.gmra.mxu0 %v26
  %v89 = vpop.f32.mrf.mxu0
  %v90 = vadd.f32 %v68, %v89
  %91 = vmatmul.f32.gmra.mxu0 %v27
  %v92 = vpop.f32.mrf.mxu0
  %v93 = vadd.f32 %v68, %v92
  %94 = vmatmul.f32.gmra.mxu0 %v28
  %v95 = vpop.f32.mrf.mxu0
  %v96 = vadd.f32 %v68, %v95
  %97 = vmatmul.f32.gmra.mxu0 %v29
  %v98 = vpop.f32.mrf.mxu0
  %v99 = vadd.f32 %v68, %v98
  %100 = vmatmul.f32.gmra.mxu0 %v30
  %v101 = vpop.f32.mrf.mxu0
  %v102 = vadd.f32 %v68, %v101
  %103 = vmatmul.f32.gmra.mxu0 %v31
  %v104 = vpop.f32.mrf.mxu0
  %v105 = vadd.f32 %v68, %v104
  %106 = vmatmul.f32.gmra.mxu0 %v32
  %v107 = vpop.f32.mrf.mxu0
  %v108 = vadd.f32 %v68, %v107
  %109 = vmatmul.f32.gmra.mxu0 %v33
  %v110 = vpop.f32.mrf.mxu0
  %v111 = vadd.f32 %v68, %v110
  %112 = vdwg.mxu0
  %113 = vmatpush.msra.mxu0 %v65
  %114 = vmatpush.msra.mxu0 %v63
  %115 = vmatpush.msra.mxu0 %v61
  %116 = vmatpush.msra.mxu0 %v59
  %117 = vmatpush.msra.mxu0 %v57
  %118 = vmatpush.msra.mxu0 %v55
  %119 = vmatpush.msra.mxu0 %v53
  %120 = vmatpush.msra.mxu0 %v51
  %121 = vmatpush.msra.mxu0 %v49
  %122 = vmatpush.msra.mxu0 %v47
  %123 = vmatpush.msra.mxu0 %v45
  %124 = vmatpush.msra.mxu0 %v43
  %125 = vmatpush.msra.mxu0 %v41
  %126 = vmatpush.msra.mxu0 %v39
  %127 = vmatpush.msra.mxu0 %v37
  %128 = vmatpush.msra.mxu0 %v35
  %129 = vmatmul.f32.gmra.mxu0 %v26
  %v130 = vpop.f32.mrf.mxu0
  %v131 = vadd.f32 %v69, %v130
  %132 = vmatmul.f32.gmra.mxu0 %v27
  %v133 = vpop.f32.mrf.mxu0
  %v134 = vadd.f32 %v69, %v133
  %135 = vmatmul.f32.gmra.mxu0 %v28
  %v136 = vpop.f32.mrf.mxu0
  %v137 = vadd.f32 %v69, %v136
  %138 = vmatmul.f32.gmra.mxu0 %v29
  %v139 = vpop.f32.mrf.mxu0
  %v140 = vadd.f32 %v69, %v139
  %141 = vmatmul.f32.gmra.mxu0 %v30
  %v142 = vpop.f32.mrf.mxu0
  %v143 = vadd.f32 %v69, %v142
  %144 = vmatmul.f32.gmra.mxu0 %v31
  %v145 = vpop.f32.mrf.mxu0
  %v146 = vadd.f32 %v69, %v145
  %147 = vmatmul.f32.gmra.mxu0 %v32
  %v148 = vpop.f32.mrf.mxu0
  %v149 = vadd.f32 %v69, %v148
  %150 = vmatmul.f32.gmra.mxu0 %v33
  %v151 = vpop.f32.mrf.mxu0
  %v152 = vadd.f32 %v69, %v151
  %153 = vdwg.mxu0
  %v154 = vlaneseq
  %v155 = vand.u32 %v154, 127
  %v156 = vadd.s32 %v155, 128
  %vm157 = vcmp.ge.s32.totalorder %v155, 128
  %vm158 = vcmp.ge.s32.totalorder %v156, 128
  %vm159 = vcmp.lt.s32.totalorder %v155, 192
  %vm160 = vcmp.lt.s32.totalorder %v156, 192
  %vm161 = vmand %vm157, %vm159
  %vm162 = vmand %vm158, %vm160
  %v163 = vld [vmem:[%s3] sm:$0xff]
  %v164 = vld [vmem:[%s3 + $0x8] sm:$0xff]
  %v165 = vld [vmem:[%s3 + $0x10] sm:$0xff]
  %v166 = vld [vmem:[%s3 + $0x18] sm:$0xff]
  %v167 = vld [vmem:[%s3 + $0x20] sm:$0xff]
  %v168 = vld [vmem:[%s3 + $0x28] sm:$0xff]
  %v169 = vld [vmem:[%s3 + $0x30] sm:$0xff]
  %v170 = vld [vmem:[%s3 + $0x38] sm:$0xff]
  %v171 = vld [vmem:[%s3 + $0x40] sm:$0xff]
  %v172 = vld [vmem:[%s3 + $0x48] sm:$0xff]
  %v173 = vld [vmem:[%s3 + $0x50] sm:$0xff]
  %v174 = vld [vmem:[%s3 + $0x58] sm:$0xff]
  %v175 = vld [vmem:[%s3 + $0x60] sm:$0xff]
  %v176 = vld [vmem:[%s3 + $0x68] sm:$0xff]
  %v177 = vld [vmem:[%s3 + $0x70] sm:$0xff]
  %v178 = vld [vmem:[%s3 + $0x78] sm:$0xff]
  %v179 = vld [vmem:[%s1] sm:$0xff]
  %vm180 = vcmask 523264
  %v182 = vsel %vm180, 0.0, 0
  %184 = vmatpush.msra.mxu0 0.0
  %185 = vmatpush.msra.mxu0 0.0
  %186 = vmatpush.msra.mxu0 0.0
  %187 = vmatpush.msra.mxu0 0.0
  %188 = vmatpush.msra.mxu0 0.0
  %189 = vmatpush.msra.mxu0 0.0
  %190 = vmatpush.msra.mxu0 0.0
  %191 = vmatpush.msra.mxu0 0.0
  %192 = vmatpush.msra.mxu0 %v177
  %193 = vmatpush.msra.mxu0 %v175
  %194 = vmatpush.msra.mxu0 %v173
  %195 = vmatpush.msra.mxu0 %v171
  %196 = vmatpush.msra.mxu0 %v169
  %197 = vmatpush.msra.mxu0 %v167
  %198 = vmatpush.msra.mxu0 %v165
  %199 = vmatpush.msra.mxu0 %v163
  %200 = vmatmul.f32.gmra.mxu0 %v182
  %v201 = vpop.f32.mrf.mxu0
  %v202 = vadd.f32 0.0, %v201
  %203 = vdwg.mxu0
  %204 = vmatpush.msra.mxu0 0.0
  %205 = vmatpush.msra.mxu0 0.0
  %206 = vmatpush.msra.mxu0 0.0
  %207 = vmatpush.msra.mxu0 0.0
  %208 = vmatpush.msra.mxu0 0.0
  %209 = vmatpush.msra.mxu0 0.0
  %210 = vmatpush.msra.mxu0 0.0
  %211 = vmatpush.msra.mxu0 0.0
  %212 = vmatpush.msra.mxu0 %v178
  %213 = vmatpush.msra.mxu0 %v176
  %214 = vmatpush.msra.mxu0 %v174
  %215 = vmatpush.msra.mxu0 %v172
  %216 = vmatpush.msra.mxu0 %v170
  %217 = vmatpush.msra.mxu0 %v168
  %218 = vmatpush.msra.mxu0 %v166
  %219 = vmatpush.msra.mxu0 %v164
  %220 = vmatmul.f32.gmra.mxu0 %v182
  %v221 = vpop.f32.mrf.mxu0
  %v222 = vadd.f32 0.0, %v221
  %223 = vdwg.mxu0
  %v224 = vadd.f32 %v90, %v202
  %v225 = vadd.f32 %v131, %v222
  %v226 = vtanh.pop %v224
  %v227 = vtanh.pop %v225
  %v228 = vxor.u32 %v224, 2147483648
  %v229 = vxor.u32 %v225, 2147483648
  %v230 = vmul.f32 %v228, 1.442695
  %v231 = vpow.pop %v230
  %v232 = vmul.f32 %v229, 1.442695
  %v233 = vpow.pop %v232
  %v234 = vadd.f32 %v231, 1.0
  %v235 = vadd.f32 %v233, 1.0
  %v236 = vrcp.pop %v234
  %v237 = vmul.f32 %v234, %v236
  %v238 = vsub.f32 1.0, %v237
  %v239 = vmul.f32 %v236, %v238
  %v240 = vadd.f32 %v236, %v239
  %vm241 = vweird.f32 %v234
  %vm242 = vweird.f32 %v236
  %vm243 = vmor %vm241, %vm242
  %v244 = vsel %vm243, %v236, %v240
  %v245 = vand.u32 2147483647, %v234
  %vm246 = vcmp.eq.f32.partialorder %v245, 8.507059e+37
  %v247 = vand.u32 %v234, 2147483648
  %v248 = vor.u32 1.1754944e-38, %v247
  %v249 = vsel %vm246, %v248, %v244
  %v250 = vmul.f32 1.0, %v249
  %v251 = vrcp.pop %v235
  %v252 = vmul.f32 %v235, %v251
  %v253 = vsub.f32 1.0, %v252
  %v254 = vmul.f32 %v251, %v253
  %v255 = vadd.f32 %v251, %v254
  %vm256 = vweird.f32 %v235
  %vm257 = vweird.f32 %v251
  %vm258 = vmor %vm256, %vm257
  %v259 = vsel %vm258, %v251, %v255
  %v260 = vand.u32 2147483647, %v235
  %vm261 = vcmp.eq.f32.partialorder %v260, 8.507059e+37
  %v262 = vand.u32 %v235, 2147483648
  %v263 = vor.u32 1.1754944e-38, %v262
  %v264 = vsel %vm261, %v263, %v259
  %v265 = vmul.f32 1.0, %v264
  %v266 = vsel %vm161, %v226, %v250
  %v267 = vsel %vm162, %v227, %v265
  %v268 = vmul.f32 %v266, 0.0
  %v269 = vmul.f32 %v266, %v267
  %271 = vrot.lane.b32.xlu0 %v269, 64
  %v272 = vpop.permute.xlu0 %271
  %v274 = vadd.f32 %v268, %v272
  %v275 = vtanh.pop %v274
  %v276 = vmul.f32 %v267, %v275
  %278 = vset.pattern.permute.xlu0 0
  %279 = vperm.xlu0 %278, %v179
  %v280 = vpop.permute.xlu0 %279
  %v282 = vmul.f32 %v280, %v276
  %v283 = vsub.f32 1.0, %v179
  %285 = vset.pattern.permute.xlu0 0
  %286 = vperm.xlu0 %285, %v283
  %v287 = vpop.permute.xlu0 %286
  %v289 = vmul.f32 %v287, 0.0
  %v290 = vadd.f32 %v282, %v289
  %v291 = vmul.f32 %v280, %v274
  %v292 = vadd.f32 %v291, %v289
  %vm293 = vcmp.gt.f32.partialorder %v179, 0.0
  %v294 = vmax.f32 %v276, -1e+30
  %v295 = vsel %vm293, 1, 0
  %296 = vset.pattern.permute.xlu0 0
  %297 = vperm.xlu0 %296, %v295
  %v298 = vpop.permute.xlu0 %297
  %vm299 = vcmp.eq.s32.totalorder %v298, 1
  %v300 = vsel %vm299, %v294, -1e+30
  %v301 = vld [vmem:[%s1 + $0x8] sm:$0xff]
  %303 = vrot.lane.b32.xlu0 %v290, 64
  %v304 = vpop.permute.xlu0 %303
  %v305 = vsel %vm180, %v304, 0
  %307 = vmatpush.msra.mxu0 0.0
  %308 = vmatpush.msra.mxu0 0.0
  %309 = vmatpush.msra.mxu0 0.0
  %310 = vmatpush.msra.mxu0 0.0
  %311 = vmatpush.msra.mxu0 0.0
  %312 = vmatpush.msra.mxu0 0.0
  %313 = vmatpush.msra.mxu0 0.0
  %314 = vmatpush.msra.mxu0 0.0
  %315 = vmatpush.msra.mxu0 %v177
  %316 = vmatpush.msra.mxu0 %v175
  %317 = vmatpush.msra.mxu0 %v173
  %318 = vmatpush.msra.mxu0 %v171
  %319 = vmatpush.msra.mxu0 %v169
  %320 = vmatpush.msra.mxu0 %v167
  %321 = vmatpush.msra.mxu0 %v165
  %322 = vmatpush.msra.mxu0 %v163
  %323 = vmatmul.f32.gmra.mxu0 %v305
  %v324 = vpop.f32.mrf.mxu0
  %v325 = vadd.f32 0.0, %v324
  %326 = vdwg.mxu0
  %327 = vmatpush.msra.mxu0 0.0
  %328 = vmatpush.msra.mxu0 0.0
  %329 = vmatpush.msra.mxu0 0.0
  %330 = vmatpush.msra.mxu0 0.0
  %331 = vmatpush.msra.mxu0 0.0
  %332 = vmatpush.msra.mxu0 0.0
  %333 = vmatpush.msra.mxu0 0.0
  %334 = vmatpush.msra.mxu0 0.0
  %335 = vmatpush.msra.mxu0 %v178
  %336 = vmatpush.msra.mxu0 %v176
  %337 = vmatpush.msra.mxu0 %v174
  %338 = vmatpush.msra.mxu0 %v172
  %339 = vmatpush.msra.mxu0 %v170
  %340 = vmatpush.msra.mxu0 %v168
  %341 = vmatpush.msra.mxu0 %v166
  %342 = vmatpush.msra.mxu0 %v164
  %343 = vmatmul.f32.gmra.mxu0 %v305
  %v344 = vpop.f32.mrf.mxu0
  %v345 = vadd.f32 0.0, %v344
  %346 = vdwg.mxu0
  %v347 = vadd.f32 %v93, %v325
  %v348 = vadd.f32 %v134, %v345
  %v349 = vtanh.pop %v347
  %v350 = vtanh.pop %v348
  %v351 = vxor.u32 %v347, 2147483648
  %v352 = vxor.u32 %v348, 2147483648
  %v353 = vmul.f32 %v351, 1.442695
  %v354 = vpow.pop %v353
  %v355 = vmul.f32 %v352, 1.442695
  %v356 = vpow.pop %v355
  %v357 = vadd.f32 %v354, 1.0
  %v358 = vadd.f32 %v356, 1.0
  %v359 = vrcp.pop %v357
  %v360 = vmul.f32 %v357, %v359
  %v361 = vsub.f32 1.0, %v360
  %v362 = vmul.f32 %v359, %v361
  %v363 = vadd.f32 %v359, %v362
  %vm364 = vweird.f32 %v357
  %vm365 = vweird.f32 %v359
  %vm366 = vmor %vm364, %vm365
  %v367 = vsel %vm366, %v359, %v363
  %v368 = vand.u32 2147483647, %v357
  %vm369 = vcmp.eq.f32.partialorder %v368, 8.507059e+37
  %v370 = vand.u32 %v357, 2147483648
  %v371 = vor.u32 1.1754944e-38, %v370
  %v372 = vsel %vm369, %v371, %v367
  %v373 = vmul.f32 1.0, %v372
  %v374 = vrcp.pop %v358
  %v375 = vmul.f32 %v358, %v374
  %v376 = vsub.f32 1.0, %v375
  %v377 = vmul.f32 %v374, %v376
  %v378 = vadd.f32 %v374, %v377
  %vm379 = vweird.f32 %v358
  %vm380 = vweird.f32 %v374
  %vm381 = vmor %vm379, %vm380
  %v382 = vsel %vm381, %v374, %v378
  %v383 = vand.u32 2147483647, %v358
  %vm384 = vcmp.eq.f32.partialorder %v383, 8.507059e+37
  %v385 = vand.u32 %v358, 2147483648
  %v386 = vor.u32 1.1754944e-38, %v385
  %v387 = vsel %vm384, %v386, %v382
  %v388 = vmul.f32 1.0, %v387
  %v389 = vsel %vm161, %v349, %v373
  %v390 = vsel %vm162, %v350, %v388
  %v391 = vmul.f32 %v389, %v292
  %v392 = vmul.f32 %v389, %v390
  %394 = vrot.lane.b32.xlu0 %v392, 64
  %v395 = vpop.permute.xlu0 %394
  %v397 = vadd.f32 %v391, %v395
  %v398 = vtanh.pop %v397
  %v399 = vmul.f32 %v390, %v398
  %401 = vset.pattern.permute.xlu0 0
  %402 = vperm.xlu0 %401, %v301
  %v403 = vpop.permute.xlu0 %402
  %v405 = vmul.f32 %v403, %v399
  %v406 = vsub.f32 1.0, %v301
  %408 = vset.pattern.permute.xlu0 0
  %409 = vperm.xlu0 %408, %v406
  %v410 = vpop.permute.xlu0 %409
  %v412 = vmul.f32 %v410, %v290
  %v413 = vadd.f32 %v405, %v412
  %v414 = vmul.f32 %v403, %v397
  %v415 = vmul.f32 %v410, %v292
  %v416 = vadd.f32 %v414, %v415
  %vm417 = vcmp.gt.f32.partialorder %v301, 0.0
  %v418 = vmax.f32 %v300, %v399
  %v419 = vsel %vm417, 1, 0
  %420 = vset.pattern.permute.xlu0 0
  %421 = vperm.xlu0 %420, %v419
  %v422 = vpop.permute.xlu0 %421
  %vm423 = vcmp.eq.s32.totalorder %v422, 1
  %v424 = vsel %vm423, %v418, %v300
  %v425 = vld [vmem:[%s1 + $0x10] sm:$0xff]
  %427 = vrot.lane.b32.xlu0 %v413, 64
  %v428 = vpop.permute.xlu0 %427
  %v429 = vsel %vm180, %v428, 0
  %431 = vmatpush.msra.mxu0 0.0
  %432 = vmatpush.msra.mxu0 0.0
  %433 = vmatpush.msra.mxu0 0.0
  %434 = vmatpush.msra.mxu0 0.0
  %435 = vmatpush.msra.mxu0 0.0
  %436 = vmatpush.msra.mxu0 0.0
  %437 = vmatpush.msra.mxu0 0.0
  %438 = vmatpush.msra.mxu0 0.0
  %439 = vmatpush.msra.mxu0 %v177
  %440 = vmatpush.msra.mxu0 %v175
  %441 = vmatpush.msra.mxu0 %v173
  %442 = vmatpush.msra.mxu0 %v171
  %443 = vmatpush.msra.mxu0 %v169
  %444 = vmatpush.msra.mxu0 %v167
  %445 = vmatpush.msra.mxu0 %v165
  %446 = vmatpush.msra.mxu0 %v163
  %447 = vmatmul.f32.gmra.mxu0 %v429
  %v448 = vpop.f32.mrf.mxu0
  %v449 = vadd.f32 0.0, %v448
  %450 = vdwg.mxu0
  %451 = vmatpush.msra.mxu0 0.0
  %452 = vmatpush.msra.mxu0 0.0
  %453 = vmatpush.msra.mxu0 0.0
  %454 = vmatpush.msra.mxu0 0.0
  %455 = vmatpush.msra.mxu0 0.0
  %456 = vmatpush.msra.mxu0 0.0
  %457 = vmatpush.msra.mxu0 0.0
  %458 = vmatpush.msra.mxu0 0.0
  %459 = vmatpush.msra.mxu0 %v178
  %460 = vmatpush.msra.mxu0 %v176
  %461 = vmatpush.msra.mxu0 %v174
  %462 = vmatpush.msra.mxu0 %v172
  %463 = vmatpush.msra.mxu0 %v170
  %464 = vmatpush.msra.mxu0 %v168
  %465 = vmatpush.msra.mxu0 %v166
  %466 = vmatpush.msra.mxu0 %v164
  %467 = vmatmul.f32.gmra.mxu0 %v429
  %v468 = vpop.f32.mrf.mxu0
  %v469 = vadd.f32 0.0, %v468
  %470 = vdwg.mxu0
  %v471 = vadd.f32 %v96, %v449
  %v472 = vadd.f32 %v137, %v469
  %v473 = vtanh.pop %v471
  %v474 = vtanh.pop %v472
  %v475 = vxor.u32 %v471, 2147483648
  %v476 = vxor.u32 %v472, 2147483648
  %v477 = vmul.f32 %v475, 1.442695
  %v478 = vpow.pop %v477
  %v479 = vmul.f32 %v476, 1.442695
  %v480 = vpow.pop %v479
  %v481 = vadd.f32 %v478, 1.0
  %v482 = vadd.f32 %v480, 1.0
  %v483 = vrcp.pop %v481
  %v484 = vmul.f32 %v481, %v483
  %v485 = vsub.f32 1.0, %v484
  %v486 = vmul.f32 %v483, %v485
  %v487 = vadd.f32 %v483, %v486
  %vm488 = vweird.f32 %v481
  %vm489 = vweird.f32 %v483
  %vm490 = vmor %vm488, %vm489
  %v491 = vsel %vm490, %v483, %v487
  %v492 = vand.u32 2147483647, %v481
  %vm493 = vcmp.eq.f32.partialorder %v492, 8.507059e+37
  %v494 = vand.u32 %v481, 2147483648
  %v495 = vor.u32 1.1754944e-38, %v494
  %v496 = vsel %vm493, %v495, %v491
  %v497 = vmul.f32 1.0, %v496
  %v498 = vrcp.pop %v482
  %v499 = vmul.f32 %v482, %v498
  %v500 = vsub.f32 1.0, %v499
  %v501 = vmul.f32 %v498, %v500
  %v502 = vadd.f32 %v498, %v501
  %vm503 = vweird.f32 %v482
  %vm504 = vweird.f32 %v498
  %vm505 = vmor %vm503, %vm504
  %v506 = vsel %vm505, %v498, %v502
  %v507 = vand.u32 2147483647, %v482
  %vm508 = vcmp.eq.f32.partialorder %v507, 8.507059e+37
  %v509 = vand.u32 %v482, 2147483648
  %v510 = vor.u32 1.1754944e-38, %v509
  %v511 = vsel %vm508, %v510, %v506
  %v512 = vmul.f32 1.0, %v511
  %v513 = vsel %vm161, %v473, %v497
  %v514 = vsel %vm162, %v474, %v512
  %v515 = vmul.f32 %v513, %v416
  %v516 = vmul.f32 %v513, %v514
  %518 = vrot.lane.b32.xlu0 %v516, 64
  %v519 = vpop.permute.xlu0 %518
  %v521 = vadd.f32 %v515, %v519
  %v522 = vtanh.pop %v521
  %v523 = vmul.f32 %v514, %v522
  %525 = vset.pattern.permute.xlu0 0
  %526 = vperm.xlu0 %525, %v425
  %v527 = vpop.permute.xlu0 %526
  %v529 = vmul.f32 %v527, %v523
  %v530 = vsub.f32 1.0, %v425
  %532 = vset.pattern.permute.xlu0 0
  %533 = vperm.xlu0 %532, %v530
  %v534 = vpop.permute.xlu0 %533
  %v536 = vmul.f32 %v534, %v413
  %v537 = vadd.f32 %v529, %v536
  %v538 = vmul.f32 %v527, %v521
  %v539 = vmul.f32 %v534, %v416
  %v540 = vadd.f32 %v538, %v539
  %vm541 = vcmp.gt.f32.partialorder %v425, 0.0
  %v542 = vmax.f32 %v424, %v523
  %v543 = vsel %vm541, 1, 0
  %544 = vset.pattern.permute.xlu0 0
  %545 = vperm.xlu0 %544, %v543
  %v546 = vpop.permute.xlu0 %545
  %vm547 = vcmp.eq.s32.totalorder %v546, 1
  %v548 = vsel %vm547, %v542, %v424
  %v549 = vld [vmem:[%s1 + $0x18] sm:$0xff]
  %551 = vrot.lane.b32.xlu0 %v537, 64
  %v552 = vpop.permute.xlu0 %551
  %v553 = vsel %vm180, %v552, 0
  %555 = vmatpush.msra.mxu0 0.0
  %556 = vmatpush.msra.mxu0 0.0
  %557 = vmatpush.msra.mxu0 0.0
  %558 = vmatpush.msra.mxu0 0.0
  %559 = vmatpush.msra.mxu0 0.0
  %560 = vmatpush.msra.mxu0 0.0
  %561 = vmatpush.msra.mxu0 0.0
  %562 = vmatpush.msra.mxu0 0.0
  %563 = vmatpush.msra.mxu0 %v177
  %564 = vmatpush.msra.mxu0 %v175
  %565 = vmatpush.msra.mxu0 %v173
  %566 = vmatpush.msra.mxu0 %v171
  %567 = vmatpush.msra.mxu0 %v169
  %568 = vmatpush.msra.mxu0 %v167
  %569 = vmatpush.msra.mxu0 %v165
  %570 = vmatpush.msra.mxu0 %v163
  %571 = vmatmul.f32.gmra.mxu0 %v553
  %v572 = vpop.f32.mrf.mxu0
  %v573 = vadd.f32 0.0, %v572
  %574 = vdwg.mxu0
  %575 = vmatpush.msra.mxu0 0.0
  %576 = vmatpush.msra.mxu0 0.0
  %577 = vmatpush.msra.mxu0 0.0
  %578 = vmatpush.msra.mxu0 0.0
  %579 = vmatpush.msra.mxu0 0.0
  %580 = vmatpush.msra.mxu0 0.0
  %581 = vmatpush.msra.mxu0 0.0
  %582 = vmatpush.msra.mxu0 0.0
  %583 = vmatpush.msra.mxu0 %v178
  %584 = vmatpush.msra.mxu0 %v176
  %585 = vmatpush.msra.mxu0 %v174
  %586 = vmatpush.msra.mxu0 %v172
  %587 = vmatpush.msra.mxu0 %v170
  %588 = vmatpush.msra.mxu0 %v168
  %589 = vmatpush.msra.mxu0 %v166
  %590 = vmatpush.msra.mxu0 %v164
  %591 = vmatmul.f32.gmra.mxu0 %v553
  %v592 = vpop.f32.mrf.mxu0
  %v593 = vadd.f32 0.0, %v592
  %594 = vdwg.mxu0
  %v595 = vadd.f32 %v99, %v573
  %v596 = vadd.f32 %v140, %v593
  %v597 = vtanh.pop %v595
  %v598 = vtanh.pop %v596
  %v599 = vxor.u32 %v595, 2147483648
  %v600 = vxor.u32 %v596, 2147483648
  %v601 = vmul.f32 %v599, 1.442695
  %v602 = vpow.pop %v601
  %v603 = vmul.f32 %v600, 1.442695
  %v604 = vpow.pop %v603
  %v605 = vadd.f32 %v602, 1.0
  %v606 = vadd.f32 %v604, 1.0
  %v607 = vrcp.pop %v605
  %v608 = vmul.f32 %v605, %v607
  %v609 = vsub.f32 1.0, %v608
  %v610 = vmul.f32 %v607, %v609
  %v611 = vadd.f32 %v607, %v610
  %vm612 = vweird.f32 %v605
  %vm613 = vweird.f32 %v607
  %vm614 = vmor %vm612, %vm613
  %v615 = vsel %vm614, %v607, %v611
  %v616 = vand.u32 2147483647, %v605
  %vm617 = vcmp.eq.f32.partialorder %v616, 8.507059e+37
  %v618 = vand.u32 %v605, 2147483648
  %v619 = vor.u32 1.1754944e-38, %v618
  %v620 = vsel %vm617, %v619, %v615
  %v621 = vmul.f32 1.0, %v620
  %v622 = vrcp.pop %v606
  %v623 = vmul.f32 %v606, %v622
  %v624 = vsub.f32 1.0, %v623
  %v625 = vmul.f32 %v622, %v624
  %v626 = vadd.f32 %v622, %v625
  %vm627 = vweird.f32 %v606
  %vm628 = vweird.f32 %v622
  %vm629 = vmor %vm627, %vm628
  %v630 = vsel %vm629, %v622, %v626
  %v631 = vand.u32 2147483647, %v606
  %vm632 = vcmp.eq.f32.partialorder %v631, 8.507059e+37
  %v633 = vand.u32 %v606, 2147483648
  %v634 = vor.u32 1.1754944e-38, %v633
  %v635 = vsel %vm632, %v634, %v630
  %v636 = vmul.f32 1.0, %v635
  %v637 = vsel %vm161, %v597, %v621
  %v638 = vsel %vm162, %v598, %v636
  %v639 = vmul.f32 %v637, %v540
  %v640 = vmul.f32 %v637, %v638
  %642 = vrot.lane.b32.xlu0 %v640, 64
  %v643 = vpop.permute.xlu0 %642
  %v645 = vadd.f32 %v639, %v643
  %v646 = vtanh.pop %v645
  %v647 = vmul.f32 %v638, %v646
  %649 = vset.pattern.permute.xlu0 0
  %650 = vperm.xlu0 %649, %v549
  %v651 = vpop.permute.xlu0 %650
  %v653 = vmul.f32 %v651, %v647
  %v654 = vsub.f32 1.0, %v549
  %656 = vset.pattern.permute.xlu0 0
  %657 = vperm.xlu0 %656, %v654
  %v658 = vpop.permute.xlu0 %657
  %v660 = vmul.f32 %v658, %v537
  %v661 = vadd.f32 %v653, %v660
  %v662 = vmul.f32 %v651, %v645
  %v663 = vmul.f32 %v658, %v540
  %v664 = vadd.f32 %v662, %v663
  %vm665 = vcmp.gt.f32.partialorder %v549, 0.0
  %v666 = vmax.f32 %v548, %v647
  %v667 = vsel %vm665, 1, 0
  %668 = vset.pattern.permute.xlu0 0
  %669 = vperm.xlu0 %668, %v667
  %v670 = vpop.permute.xlu0 %669
  %vm671 = vcmp.eq.s32.totalorder %v670, 1
  %v672 = vsel %vm671, %v666, %v548
  %v673 = vld [vmem:[%s1 + $0x20] sm:$0xff]
  %675 = vrot.lane.b32.xlu0 %v661, 64
  %v676 = vpop.permute.xlu0 %675
  %v677 = vsel %vm180, %v676, 0
  %679 = vmatpush.msra.mxu0 0.0
  %680 = vmatpush.msra.mxu0 0.0
  %681 = vmatpush.msra.mxu0 0.0
  %682 = vmatpush.msra.mxu0 0.0
  %683 = vmatpush.msra.mxu0 0.0
  %684 = vmatpush.msra.mxu0 0.0
  %685 = vmatpush.msra.mxu0 0.0
  %686 = vmatpush.msra.mxu0 0.0
  %687 = vmatpush.msra.mxu0 %v177
  %688 = vmatpush.msra.mxu0 %v175
  %689 = vmatpush.msra.mxu0 %v173
  %690 = vmatpush.msra.mxu0 %v171
  %691 = vmatpush.msra.mxu0 %v169
  %692 = vmatpush.msra.mxu0 %v167
  %693 = vmatpush.msra.mxu0 %v165
  %694 = vmatpush.msra.mxu0 %v163
  %695 = vmatmul.f32.gmra.mxu0 %v677
  %v696 = vpop.f32.mrf.mxu0
  %v697 = vadd.f32 0.0, %v696
  %698 = vdwg.mxu0
  %699 = vmatpush.msra.mxu0 0.0
  %700 = vmatpush.msra.mxu0 0.0
  %701 = vmatpush.msra.mxu0 0.0
  %702 = vmatpush.msra.mxu0 0.0
  %703 = vmatpush.msra.mxu0 0.0
  %704 = vmatpush.msra.mxu0 0.0
  %705 = vmatpush.msra.mxu0 0.0
  %706 = vmatpush.msra.mxu0 0.0
  %707 = vmatpush.msra.mxu0 %v178
  %708 = vmatpush.msra.mxu0 %v176
  %709 = vmatpush.msra.mxu0 %v174
  %710 = vmatpush.msra.mxu0 %v172
  %711 = vmatpush.msra.mxu0 %v170
  %712 = vmatpush.msra.mxu0 %v168
  %713 = vmatpush.msra.mxu0 %v166
  %714 = vmatpush.msra.mxu0 %v164
  %715 = vmatmul.f32.gmra.mxu0 %v677
  %v716 = vpop.f32.mrf.mxu0
  %v717 = vadd.f32 0.0, %v716
  %718 = vdwg.mxu0
  %v719 = vadd.f32 %v102, %v697
  %v720 = vadd.f32 %v143, %v717
  %v721 = vtanh.pop %v719
  %v722 = vtanh.pop %v720
  %v723 = vxor.u32 %v719, 2147483648
  %v724 = vxor.u32 %v720, 2147483648
  %v725 = vmul.f32 %v723, 1.442695
  %v726 = vpow.pop %v725
  %v727 = vmul.f32 %v724, 1.442695
  %v728 = vpow.pop %v727
  %v729 = vadd.f32 %v726, 1.0
  %v730 = vadd.f32 %v728, 1.0
  %v731 = vrcp.pop %v729
  %v732 = vmul.f32 %v729, %v731
  %v733 = vsub.f32 1.0, %v732
  %v734 = vmul.f32 %v731, %v733
  %v735 = vadd.f32 %v731, %v734
  %vm736 = vweird.f32 %v729
  %vm737 = vweird.f32 %v731
  %vm738 = vmor %vm736, %vm737
  %v739 = vsel %vm738, %v731, %v735
  %v740 = vand.u32 2147483647, %v729
  %vm741 = vcmp.eq.f32.partialorder %v740, 8.507059e+37
  %v742 = vand.u32 %v729, 2147483648
  %v743 = vor.u32 1.1754944e-38, %v742
  %v744 = vsel %vm741, %v743, %v739
  %v745 = vmul.f32 1.0, %v744
  %v746 = vrcp.pop %v730
  %v747 = vmul.f32 %v730, %v746
  %v748 = vsub.f32 1.0, %v747
  %v749 = vmul.f32 %v746, %v748
  %v750 = vadd.f32 %v746, %v749
  %vm751 = vweird.f32 %v730
  %vm752 = vweird.f32 %v746
  %vm753 = vmor %vm751, %vm752
  %v754 = vsel %vm753, %v746, %v750
  %v755 = vand.u32 2147483647, %v730
  %vm756 = vcmp.eq.f32.partialorder %v755, 8.507059e+37
  %v757 = vand.u32 %v730, 2147483648
  %v758 = vor.u32 1.1754944e-38, %v757
  %v759 = vsel %vm756, %v758, %v754
  %v760 = vmul.f32 1.0, %v759
  %v761 = vsel %vm161, %v721, %v745
  %v762 = vsel %vm162, %v722, %v760
  %v763 = vmul.f32 %v761, %v664
  %v764 = vmul.f32 %v761, %v762
  %766 = vrot.lane.b32.xlu0 %v764, 64
  %v767 = vpop.permute.xlu0 %766
  %v769 = vadd.f32 %v763, %v767
  %v770 = vtanh.pop %v769
  %v771 = vmul.f32 %v762, %v770
  %773 = vset.pattern.permute.xlu0 0
  %774 = vperm.xlu0 %773, %v673
  %v775 = vpop.permute.xlu0 %774
  %v777 = vmul.f32 %v775, %v771
  %v778 = vsub.f32 1.0, %v673
  %780 = vset.pattern.permute.xlu0 0
  %781 = vperm.xlu0 %780, %v778
  %v782 = vpop.permute.xlu0 %781
  %v784 = vmul.f32 %v782, %v661
  %v785 = vadd.f32 %v777, %v784
  %v786 = vmul.f32 %v775, %v769
  %v787 = vmul.f32 %v782, %v664
  %v788 = vadd.f32 %v786, %v787
  %vm789 = vcmp.gt.f32.partialorder %v673, 0.0
  %v790 = vmax.f32 %v672, %v771
  %v791 = vsel %vm789, 1, 0
  %792 = vset.pattern.permute.xlu0 0
  %793 = vperm.xlu0 %792, %v791
  %v794 = vpop.permute.xlu0 %793
  %vm795 = vcmp.eq.s32.totalorder %v794, 1
  %v796 = vsel %vm795, %v790, %v672
  %v797 = vld [vmem:[%s1 + $0x28] sm:$0xff]
  %799 = vrot.lane.b32.xlu0 %v785, 64
  %v800 = vpop.permute.xlu0 %799
  %v801 = vsel %vm180, %v800, 0
  %803 = vmatpush.msra.mxu0 0.0
  %804 = vmatpush.msra.mxu0 0.0
  %805 = vmatpush.msra.mxu0 0.0
  %806 = vmatpush.msra.mxu0 0.0
  %807 = vmatpush.msra.mxu0 0.0
  %808 = vmatpush.msra.mxu0 0.0
  %809 = vmatpush.msra.mxu0 0.0
  %810 = vmatpush.msra.mxu0 0.0
  %811 = vmatpush.msra.mxu0 %v177
  %812 = vmatpush.msra.mxu0 %v175
  %813 = vmatpush.msra.mxu0 %v173
  %814 = vmatpush.msra.mxu0 %v171
  %815 = vmatpush.msra.mxu0 %v169
  %816 = vmatpush.msra.mxu0 %v167
  %817 = vmatpush.msra.mxu0 %v165
  %818 = vmatpush.msra.mxu0 %v163
  %819 = vmatmul.f32.gmra.mxu0 %v801
  %v820 = vpop.f32.mrf.mxu0
  %v821 = vadd.f32 0.0, %v820
  %822 = vdwg.mxu0
  %823 = vmatpush.msra.mxu0 0.0
  %824 = vmatpush.msra.mxu0 0.0
  %825 = vmatpush.msra.mxu0 0.0
  %826 = vmatpush.msra.mxu0 0.0
  %827 = vmatpush.msra.mxu0 0.0
  %828 = vmatpush.msra.mxu0 0.0
  %829 = vmatpush.msra.mxu0 0.0
  %830 = vmatpush.msra.mxu0 0.0
  %831 = vmatpush.msra.mxu0 %v178
  %832 = vmatpush.msra.mxu0 %v176
  %833 = vmatpush.msra.mxu0 %v174
  %834 = vmatpush.msra.mxu0 %v172
  %835 = vmatpush.msra.mxu0 %v170
  %836 = vmatpush.msra.mxu0 %v168
  %837 = vmatpush.msra.mxu0 %v166
  %838 = vmatpush.msra.mxu0 %v164
  %839 = vmatmul.f32.gmra.mxu0 %v801
  %v840 = vpop.f32.mrf.mxu0
  %v841 = vadd.f32 0.0, %v840
  %842 = vdwg.mxu0
  %v843 = vadd.f32 %v105, %v821
  %v844 = vadd.f32 %v146, %v841
  %v845 = vtanh.pop %v843
  %v846 = vtanh.pop %v844
  %v847 = vxor.u32 %v843, 2147483648
  %v848 = vxor.u32 %v844, 2147483648
  %v849 = vmul.f32 %v847, 1.442695
  %v850 = vpow.pop %v849
  %v851 = vmul.f32 %v848, 1.442695
  %v852 = vpow.pop %v851
  %v853 = vadd.f32 %v850, 1.0
  %v854 = vadd.f32 %v852, 1.0
  %v855 = vrcp.pop %v853
  %v856 = vmul.f32 %v853, %v855
  %v857 = vsub.f32 1.0, %v856
  %v858 = vmul.f32 %v855, %v857
  %v859 = vadd.f32 %v855, %v858
  %vm860 = vweird.f32 %v853
  %vm861 = vweird.f32 %v855
  %vm862 = vmor %vm860, %vm861
  %v863 = vsel %vm862, %v855, %v859
  %v864 = vand.u32 2147483647, %v853
  %vm865 = vcmp.eq.f32.partialorder %v864, 8.507059e+37
  %v866 = vand.u32 %v853, 2147483648
  %v867 = vor.u32 1.1754944e-38, %v866
  %v868 = vsel %vm865, %v867, %v863
  %v869 = vmul.f32 1.0, %v868
  %v870 = vrcp.pop %v854
  %v871 = vmul.f32 %v854, %v870
  %v872 = vsub.f32 1.0, %v871
  %v873 = vmul.f32 %v870, %v872
  %v874 = vadd.f32 %v870, %v873
  %vm875 = vweird.f32 %v854
  %vm876 = vweird.f32 %v870
  %vm877 = vmor %vm875, %vm876
  %v878 = vsel %vm877, %v870, %v874
  %v879 = vand.u32 2147483647, %v854
  %vm880 = vcmp.eq.f32.partialorder %v879, 8.507059e+37
  %v881 = vand.u32 %v854, 2147483648
  %v882 = vor.u32 1.1754944e-38, %v881
  %v883 = vsel %vm880, %v882, %v878
  %v884 = vmul.f32 1.0, %v883
  %v885 = vsel %vm161, %v845, %v869
  %v886 = vsel %vm162, %v846, %v884
  %v887 = vmul.f32 %v885, %v788
  %v888 = vmul.f32 %v885, %v886
  %890 = vrot.lane.b32.xlu0 %v888, 64
  %v891 = vpop.permute.xlu0 %890
  %v893 = vadd.f32 %v887, %v891
  %v894 = vtanh.pop %v893
  %v895 = vmul.f32 %v886, %v894
  %897 = vset.pattern.permute.xlu0 0
  %898 = vperm.xlu0 %897, %v797
  %v899 = vpop.permute.xlu0 %898
  %v901 = vmul.f32 %v899, %v895
  %v902 = vsub.f32 1.0, %v797
  %904 = vset.pattern.permute.xlu0 0
  %905 = vperm.xlu0 %904, %v902
  %v906 = vpop.permute.xlu0 %905
  %v908 = vmul.f32 %v906, %v785
  %v909 = vadd.f32 %v901, %v908
  %v910 = vmul.f32 %v899, %v893
  %v911 = vmul.f32 %v906, %v788
  %v912 = vadd.f32 %v910, %v911
  %vm913 = vcmp.gt.f32.partialorder %v797, 0.0
  %v914 = vmax.f32 %v796, %v895
  %v915 = vsel %vm913, 1, 0
  %916 = vset.pattern.permute.xlu0 0
  %917 = vperm.xlu0 %916, %v915
  %v918 = vpop.permute.xlu0 %917
  %vm919 = vcmp.eq.s32.totalorder %v918, 1
  %v920 = vsel %vm919, %v914, %v796
  %v921 = vld [vmem:[%s1 + $0x30] sm:$0xff]
  %923 = vrot.lane.b32.xlu0 %v909, 64
  %v924 = vpop.permute.xlu0 %923
  %v925 = vsel %vm180, %v924, 0
  %927 = vmatpush.msra.mxu0 0.0
  %928 = vmatpush.msra.mxu0 0.0
  %929 = vmatpush.msra.mxu0 0.0
  %930 = vmatpush.msra.mxu0 0.0
  %931 = vmatpush.msra.mxu0 0.0
  %932 = vmatpush.msra.mxu0 0.0
  %933 = vmatpush.msra.mxu0 0.0
  %934 = vmatpush.msra.mxu0 0.0
  %935 = vmatpush.msra.mxu0 %v177
  %936 = vmatpush.msra.mxu0 %v175
  %937 = vmatpush.msra.mxu0 %v173
  %938 = vmatpush.msra.mxu0 %v171
  %939 = vmatpush.msra.mxu0 %v169
  %940 = vmatpush.msra.mxu0 %v167
  %941 = vmatpush.msra.mxu0 %v165
  %942 = vmatpush.msra.mxu0 %v163
  %943 = vmatmul.f32.gmra.mxu0 %v925
  %v944 = vpop.f32.mrf.mxu0
  %v945 = vadd.f32 0.0, %v944
  %946 = vdwg.mxu0
  %947 = vmatpush.msra.mxu0 0.0
  %948 = vmatpush.msra.mxu0 0.0
  %949 = vmatpush.msra.mxu0 0.0
  %950 = vmatpush.msra.mxu0 0.0
  %951 = vmatpush.msra.mxu0 0.0
  %952 = vmatpush.msra.mxu0 0.0
  %953 = vmatpush.msra.mxu0 0.0
  %954 = vmatpush.msra.mxu0 0.0
  %955 = vmatpush.msra.mxu0 %v178
  %956 = vmatpush.msra.mxu0 %v176
  %957 = vmatpush.msra.mxu0 %v174
  %958 = vmatpush.msra.mxu0 %v172
  %959 = vmatpush.msra.mxu0 %v170
  %960 = vmatpush.msra.mxu0 %v168
  %961 = vmatpush.msra.mxu0 %v166
  %962 = vmatpush.msra.mxu0 %v164
  %963 = vmatmul.f32.gmra.mxu0 %v925
  %v964 = vpop.f32.mrf.mxu0
  %v965 = vadd.f32 0.0, %v964
  %966 = vdwg.mxu0
  %v967 = vadd.f32 %v108, %v945
  %v968 = vadd.f32 %v149, %v965
  %v969 = vtanh.pop %v967
  %v970 = vtanh.pop %v968
  %v971 = vxor.u32 %v967, 2147483648
  %v972 = vxor.u32 %v968, 2147483648
  %v973 = vmul.f32 %v971, 1.442695
  %v974 = vpow.pop %v973
  %v975 = vmul.f32 %v972, 1.442695
  %v976 = vpow.pop %v975
  %v977 = vadd.f32 %v974, 1.0
  %v978 = vadd.f32 %v976, 1.0
  %v979 = vrcp.pop %v977
  %v980 = vmul.f32 %v977, %v979
  %v981 = vsub.f32 1.0, %v980
  %v982 = vmul.f32 %v979, %v981
  %v983 = vadd.f32 %v979, %v982
  %vm984 = vweird.f32 %v977
  %vm985 = vweird.f32 %v979
  %vm986 = vmor %vm984, %vm985
  %v987 = vsel %vm986, %v979, %v983
  %v988 = vand.u32 2147483647, %v977
  %vm989 = vcmp.eq.f32.partialorder %v988, 8.507059e+37
  %v990 = vand.u32 %v977, 2147483648
  %v991 = vor.u32 1.1754944e-38, %v990
  %v992 = vsel %vm989, %v991, %v987
  %v993 = vmul.f32 1.0, %v992
  %v994 = vrcp.pop %v978
  %v995 = vmul.f32 %v978, %v994
  %v996 = vsub.f32 1.0, %v995
  %v997 = vmul.f32 %v994, %v996
  %v998 = vadd.f32 %v994, %v997
  %vm999 = vweird.f32 %v978
  %vm1000 = vweird.f32 %v994
  %vm1001 = vmor %vm999, %vm1000
  %v1002 = vsel %vm1001, %v994, %v998
  %v1003 = vand.u32 2147483647, %v978
  %vm1004 = vcmp.eq.f32.partialorder %v1003, 8.507059e+37
  %v1005 = vand.u32 %v978, 2147483648
  %v1006 = vor.u32 1.1754944e-38, %v1005
  %v1007 = vsel %vm1004, %v1006, %v1002
  %v1008 = vmul.f32 1.0, %v1007
  %v1009 = vsel %vm161, %v969, %v993
  %v1010 = vsel %vm162, %v970, %v1008
  %v1011 = vmul.f32 %v1009, %v912
  %v1012 = vmul.f32 %v1009, %v1010
  %1014 = vrot.lane.b32.xlu0 %v1012, 64
  %v1015 = vpop.permute.xlu0 %1014
  %v1017 = vadd.f32 %v1011, %v1015
  %v1018 = vtanh.pop %v1017
  %v1019 = vmul.f32 %v1010, %v1018
  %1021 = vset.pattern.permute.xlu0 0
  %1022 = vperm.xlu0 %1021, %v921
  %v1023 = vpop.permute.xlu0 %1022
  %v1025 = vmul.f32 %v1023, %v1019
  %v1026 = vsub.f32 1.0, %v921
  %1028 = vset.pattern.permute.xlu0 0
  %1029 = vperm.xlu0 %1028, %v1026
  %v1030 = vpop.permute.xlu0 %1029
  %v1032 = vmul.f32 %v1030, %v909
  %v1033 = vadd.f32 %v1025, %v1032
  %v1034 = vmul.f32 %v1023, %v1017
  %v1035 = vmul.f32 %v1030, %v912
  %v1036 = vadd.f32 %v1034, %v1035
  %vm1037 = vcmp.gt.f32.partialorder %v921, 0.0
  %v1038 = vmax.f32 %v920, %v1019
  %v1039 = vsel %vm1037, 1, 0
  %1040 = vset.pattern.permute.xlu0 0
  %1041 = vperm.xlu0 %1040, %v1039
  %v1042 = vpop.permute.xlu0 %1041
  %vm1043 = vcmp.eq.s32.totalorder %v1042, 1
  %v1044 = vsel %vm1043, %v1038, %v920
  %v1045 = vld [vmem:[%s1 + $0x38] sm:$0xff]
  %1047 = vrot.lane.b32.xlu0 %v1033, 64
  %v1048 = vpop.permute.xlu0 %1047
  %v1049 = vsel %vm180, %v1048, 0
  %1051 = vmatpush.msra.mxu0 0.0
  %1052 = vmatpush.msra.mxu0 0.0
  %1053 = vmatpush.msra.mxu0 0.0
  %1054 = vmatpush.msra.mxu0 0.0
  %1055 = vmatpush.msra.mxu0 0.0
  %1056 = vmatpush.msra.mxu0 0.0
  %1057 = vmatpush.msra.mxu0 0.0
  %1058 = vmatpush.msra.mxu0 0.0
  %1059 = vmatpush.msra.mxu0 %v177
  %1060 = vmatpush.msra.mxu0 %v175
  %1061 = vmatpush.msra.mxu0 %v173
  %1062 = vmatpush.msra.mxu0 %v171
  %1063 = vmatpush.msra.mxu0 %v169
  %1064 = vmatpush.msra.mxu0 %v167
  %1065 = vmatpush.msra.mxu0 %v165
  %1066 = vmatpush.msra.mxu0 %v163
  %1067 = vmatmul.f32.gmra.mxu0 %v1049
  %v1068 = vpop.f32.mrf.mxu0
  %v1069 = vadd.f32 0.0, %v1068
  %1070 = vdwg.mxu0
  %1071 = vmatpush.msra.mxu0 0.0
  %1072 = vmatpush.msra.mxu0 0.0
  %1073 = vmatpush.msra.mxu0 0.0
  %1074 = vmatpush.msra.mxu0 0.0
  %1075 = vmatpush.msra.mxu0 0.0
  %1076 = vmatpush.msra.mxu0 0.0
  %1077 = vmatpush.msra.mxu0 0.0
  %1078 = vmatpush.msra.mxu0 0.0
  %1079 = vmatpush.msra.mxu0 %v178
  %1080 = vmatpush.msra.mxu0 %v176
  %1081 = vmatpush.msra.mxu0 %v174
  %1082 = vmatpush.msra.mxu0 %v172
  %1083 = vmatpush.msra.mxu0 %v170
  %1084 = vmatpush.msra.mxu0 %v168
  %1085 = vmatpush.msra.mxu0 %v166
  %1086 = vmatpush.msra.mxu0 %v164
  %1087 = vmatmul.f32.gmra.mxu0 %v1049
  %v1088 = vpop.f32.mrf.mxu0
  %v1089 = vadd.f32 0.0, %v1088
  %1090 = vdwg.mxu0
  %v1091 = vadd.f32 %v111, %v1069
  %v1092 = vadd.f32 %v152, %v1089
  %v1093 = vtanh.pop %v1091
  %v1094 = vtanh.pop %v1092
  %v1095 = vxor.u32 %v1091, 2147483648
  %v1096 = vxor.u32 %v1092, 2147483648
  %v1097 = vmul.f32 %v1095, 1.442695
  %v1098 = vpow.pop %v1097
  %v1099 = vmul.f32 %v1096, 1.442695
  %v1100 = vpow.pop %v1099
  %v1101 = vadd.f32 %v1098, 1.0
  %v1102 = vadd.f32 %v1100, 1.0
  %v1103 = vrcp.pop %v1101
  %v1104 = vmul.f32 %v1101, %v1103
  %v1105 = vsub.f32 1.0, %v1104
  %v1106 = vmul.f32 %v1103, %v1105
  %v1107 = vadd.f32 %v1103, %v1106
  %vm1108 = vweird.f32 %v1101
  %vm1109 = vweird.f32 %v1103
  %vm1110 = vmor %vm1108, %vm1109
  %v1111 = vsel %vm1110, %v1103, %v1107
  %v1112 = vand.u32 2147483647, %v1101
  %vm1113 = vcmp.eq.f32.partialorder %v1112, 8.507059e+37
  %v1114 = vand.u32 %v1101, 2147483648
  %v1115 = vor.u32 1.1754944e-38, %v1114
  %v1116 = vsel %vm1113, %v1115, %v1111
  %v1117 = vmul.f32 1.0, %v1116
  %v1118 = vrcp.pop %v1102
  %v1119 = vmul.f32 %v1102, %v1118
  %v1120 = vsub.f32 1.0, %v1119
  %v1121 = vmul.f32 %v1118, %v1120
  %v1122 = vadd.f32 %v1118, %v1121
  %vm1123 = vweird.f32 %v1102
  %vm1124 = vweird.f32 %v1118
  %vm1125 = vmor %vm1123, %vm1124
  %v1126 = vsel %vm1125, %v1118, %v1122
  %v1127 = vand.u32 2147483647, %v1102
  %vm1128 = vcmp.eq.f32.partialorder %v1127, 8.507059e+37
  %v1129 = vand.u32 %v1102, 2147483648
  %v1130 = vor.u32 1.1754944e-38, %v1129
  %v1131 = vsel %vm1128, %v1130, %v1126
  %v1132 = vmul.f32 1.0, %v1131
  %v1133 = vsel %vm161, %v1093, %v1117
  %v1134 = vsel %vm162, %v1094, %v1132
  %v1135 = vmul.f32 %v1133, %v1036
  %v1136 = vmul.f32 %v1133, %v1134
  %1138 = vrot.lane.b32.xlu0 %v1136, 64
  %v1139 = vpop.permute.xlu0 %1138
  %v1141 = vadd.f32 %v1135, %v1139
  %v1142 = vtanh.pop %v1141
  %v1143 = vmul.f32 %v1134, %v1142
  %vm1144 = vcmp.gt.f32.partialorder %v1045, 0.0
  %v1145 = vmax.f32 %v1044, %v1143
  %v1146 = vsel %vm1144, 1, 0
  %1147 = vset.pattern.permute.xlu0 0
  %1148 = vperm.xlu0 %1147, %v1146
  %v1149 = vpop.permute.xlu0 %1148
  %vm1150 = vcmp.eq.s32.totalorder %v1149, 1
  %v1151 = vsel %vm1150, %v1145, %v1044
  %v1152 = vld [vmem:[%s5] sm:$0xff]
  %v1153 = vld [vmem:[%s5 + $0x8] sm:$0xff]
  %v1154 = vld [vmem:[%s5 + $0x10] sm:$0xff]
  %v1155 = vld [vmem:[%s5 + $0x18] sm:$0xff]
  %v1156 = vld [vmem:[%s5 + $0x20] sm:$0xff]
  %v1157 = vld [vmem:[%s5 + $0x28] sm:$0xff]
  %v1158 = vld [vmem:[%s5 + $0x30] sm:$0xff]
  %v1159 = vld [vmem:[%s5 + $0x38] sm:$0xff]
  %v1160 = vld [vmem:[%s6] sm:$0x1]
  %v1162 = vperm.slane %v1160, 0
  %1165 = vrot.lane.b32.xlu0 %v1151, 64
  %v1166 = vpop.permute.xlu0 %1165
  %v1167 = vsel %vm180, %v1166, 0
  %1169 = vmatpush.msra.mxu0 0.0
  %1170 = vmatpush.msra.mxu0 0.0
  %1171 = vmatpush.msra.mxu0 0.0
  %1172 = vmatpush.msra.mxu0 0.0
  %1173 = vmatpush.msra.mxu0 0.0
  %1174 = vmatpush.msra.mxu0 0.0
  %1175 = vmatpush.msra.mxu0 0.0
  %1176 = vmatpush.msra.mxu0 0.0
  %1177 = vmatpush.msra.mxu0 %v1159
  %1178 = vmatpush.msra.mxu0 %v1158
  %1179 = vmatpush.msra.mxu0 %v1157
  %1180 = vmatpush.msra.mxu0 %v1156
  %1181 = vmatpush.msra.mxu0 %v1155
  %1182 = vmatpush.msra.mxu0 %v1154
  %1183 = vmatpush.msra.mxu0 %v1153
  %1184 = vmatpush.msra.mxu0 %v1152
  %1185 = vmatmul.f32.gmra.mxu0 %v1167
  %v1186 = vpop.f32.mrf.mxu0
  %v1187 = vadd.f32 %v1162, %v1186
  %1188 = vdwg.mxu0
  %1189 = vst [vmem:[%s7] sm:$0xff] %v1187
  // Predicated region
  $region30: #{ehr_forward.3} parent=0 // pred_check
    _
  $region31: #{ehr_forward.3} parent=0 // pred_check_branch
    %1191 = sbr.rel (0) target = $region33
  $region32: #{ehr_forward.3} parent=0 // pred_region
    _
  $region33: #{ehr_forward.3} parent=0 // pred_fallthru
    _
  // Predicated region
  $region34: #{ehr_forward.3} parent=0 // pred_check
    _
  $region35: #{ehr_forward.3} parent=0 // pred_check_branch
    %1193 = sbr.rel (0) target = $region37
  $region36: #{ehr_forward.3} parent=0 // pred_region
    _
  $region37: #{ehr_forward.3} parent=0 // pred_fallthru
    _

</llo_original>
